<compile_context>
chip_gen: v7x
topology: tpu7x:2x2x1
jax: 0.10.0
libtpu: 0.0.40
codegen_flags: <defaults>
</compile_context>

<pallas_src>
import jax
import jax.numpy as jnp
from jax.experimental import pallas as pl
from jax.experimental.pallas import tpu as pltpu


def _round_up(n, m):
    return ((n + m - 1) // m) * m


def _padded_layout(layer_dims):
    """Padded fan-in/fan-out per layer.

    Fan-outs pad to 128 lanes (MXU/vreg lane width).  Layer-0 fan-in pads only
    to 16 sublanes (bf16 packing); deeper fan-ins equal the previous layer's
    padded fan-out since activations carry that lane width.
    """
    out_pads = tuple(_round_up(d, 128) for d in layer_dims[1:])
    in_pads = (_round_up(layer_dims[0], 16),) + out_pads[:-1]
    return in_pads, out_pads


def make_mlp_kernel(out_pads):
    """Fused 4-layer MLP kernel for a given padded layout."""

    def kernel(x_ref, w0_ref, w1_ref, w2_ref, w3_ref, b_ref, o_ref):
        # x_ref: (tile_m, in_pad0) bf16
        # wN_ref: (in_padN, out_padN) bf16 (tight per-layer padding)
        # b_ref: (8, max_out) f32
        # o_ref: (tile_m, out_pads[-1]) f32  (lane-dense 128-wide store)
        h = x_ref[...]
        for i, w_ref in enumerate((w0_ref, w1_ref, w2_ref, w3_ref)):
            b = b_ref[i:i + 1, 0:out_pads[i]]            # static, aligned slice
            # MXU matmul with f32 accumulation; bias add on VPU.
            h = jnp.dot(h.astype(jnp.bfloat16), w_ref[...],
                        preferred_element_type=jnp.float32) + b
        # Final sigmoid on the f32 accumulator (EUP).
        o_ref[...] = jax.nn.sigmoid(h)

    return kernel


def pack_params(params, layer_dims):
    """Pack 4 (in,out) weights into tightly padded bf16 arrays + one f32 bias slab.

    Call once; reuse the packed arrays across forward calls.
    """
    in_pads, out_pads = _padded_layout(layer_dims)
    max_out = max(out_pads)

    weights = []
    b_packed = jnp.zeros((8, max_out), jnp.float32)
    for i, (w, b) in enumerate(params):
        fin, fout = w.shape
        wp = jnp.zeros((in_pads[i], out_pads[i]), jnp.bfloat16)
        wp = wp.at[:fin, :fout].set(w.astype(jnp.bfloat16))
        weights.append(wp)
        b_packed = b_packed.at[i, :fout].set(b.reshape(-1).astype(jnp.float32))
    return tuple(weights), b_packed


def mlp_forward(x, weights, b_packed, layer_dims, *, tile_m=128):
    """Run the fused MLP kernel on (batch, input_dim) f32 input."""
    batch, input_dim = x.shape
    out_dim = layer_dims[-1]
    in_pads, out_pads = _padded_layout(layer_dims)

    # Batch tiling: single tile for tiny batches; larger batches get a grid
    # axis ("parallel") over which the weight blocks stay VMEM-resident.
    pb = _round_up(batch, 8)
    tile_m = min(_round_up(tile_m, 8), pb)
    pb = _round_up(pb, tile_m)
    n_tiles = pb // tile_m

    # Zero-pad the input to a lane/sublane-aligned bf16 tile.
    x_pad = jnp.zeros((pb, in_pads[0]), jnp.bfloat16)
    x_pad = x_pad.at[:batch, :input_dim].set(x.astype(jnp.bfloat16))

    kernel = make_mlp_kernel(out_pads)

    # Constant index_map => block fetched once and kept resident across the grid.
    def resident(a):
        return pl.BlockSpec(a.shape, lambda i: (0,) * a.ndim)

    weight_bytes = sum(int(w.size) * w.dtype.itemsize for w in weights)
    bytes_accessed = (weight_bytes
                      + int(x_pad.size) * 2
                      + int(b_packed.size) * 4
                      + pb * out_pads[-1] * 4)
    flops = 2 * pb * sum(ip * op for ip, op in zip(in_pads, out_pads))
    cost = pl.CostEstimate(flops=flops,
                           transcendentals=pb * out_pads[-1],
                           bytes_accessed=bytes_accessed)

    out_pad = pl.pallas_call(
        kernel,
        out_shape=jax.ShapeDtypeStruct((pb, out_pads[-1]), jnp.float32),
        grid=(n_tiles,),
        in_specs=[pl.BlockSpec((tile_m, in_pads[0]), lambda i: (i, 0))]
                 + [resident(w) for w in weights]
                 + [resident(b_packed)],
        out_specs=pl.BlockSpec((tile_m, out_pads[-1]), lambda i: (i, 0)),
        compiler_params=pltpu.CompilerParams(
            dimension_semantics=("parallel",)),
        cost_estimate=cost,
    )(x_pad, *weights, b_packed)

    # Strip batch/lane padding outside the kernel.
    return out_pad[:batch, :out_dim]


def init_params(key, input_dim, out_dim):
    """Deterministic init mimicking PyTorch's U(-1/sqrt(fan_in), 1/sqrt(fan_in))."""
    dims = [input_dim, 600, 400, 200, out_dim]
    params = []
    for i in range(4):
        fan_in, fan_out = dims[i], dims[i + 1]
        key, kw, kb = jax.random.split(key, 3)
        bound = 1.0 / jnp.sqrt(fan_in)
        # stored as (in, out) -- transpose of PyTorch's (out, in)
        w = jax.random.uniform(kw, (fan_in, fan_out), jnp.float32, -bound, bound)
        b = jax.random.uniform(kb, (1, fan_out), jnp.float32, -bound, bound)
        params.append((w, b))
    return params


def mlp_reference_bf16(x, params):
    """Pure-JAX reference matching the kernel's numerics (bf16 matmul, f32 accum)."""
    h = x
    for (w, b) in params:
        h = jnp.dot(h.astype(jnp.bfloat16), w.astype(jnp.bfloat16),
                    preferred_element_type=jnp.float32) + b
    return jax.nn.sigmoid(h)


def mlp_reference_f32(x, params):
    """Pure-f32 reference (PyTorch-module semantics: no hidden activations)."""
    h = x
    for (w, b) in params:
        h = h @ w + b
    return jax.nn.sigmoid(h)


if __name__ == "__main__":
    key = jax.random.PRNGKey(0)
    input_dim, out_dim, batch = 32, 2, 2
    layer_dims = (input_dim, 600, 400, 200, out_dim)

    kx, kp = jax.random.split(key)
    x = jax.random.normal(kx, (batch, input_dim), jnp.float32)
    params = init_params(kp, input_dim, out_dim)

    # Pack once (outside the jitted forward) so no scatter HLO is paid per call.
    weights, b_packed = pack_params(params, layer_dims)

    fwd = jax.jit(lambda xx, ws, bb: mlp_forward(xx, ws, bb, layer_dims))
    out = jax.block_until_ready(fwd(x, weights, b_packed))

    ref_bf16 = mlp_reference_bf16(x, params)   # same quantization as the kernel
    ref_f32 = mlp_reference_f32(x, params)     # full-f32 module semantics

    assert out.shape == (batch, out_dim)
    assert jnp.allclose(out, ref_bf16, atol=1e-4, rtol=1e-4), "mismatch vs bf16 reference"
    assert jnp.allclose(out, ref_f32, atol=5e-2), "mismatch vs f32 reference"

    print("KERNEL_OK")
</pallas_src>

<mosaic_0001>
module attributes {stable_mosaic.version = 11 : i64} {
  func.func @kernel(%arg0: i32, %arg1: memref<8x32xbf16, #tpu.memory_space<vmem>>, %arg2: memref<32x640xbf16, #tpu.memory_space<vmem>>, %arg3: memref<640x512xbf16, #tpu.memory_space<vmem>>, %arg4: memref<512x256xbf16, #tpu.memory_space<vmem>>, %arg5: memref<256x128xbf16, #tpu.memory_space<vmem>>, %arg6: memref<8x640xf32, #tpu.memory_space<vmem>>, %arg7: memref<8x128xf32, #tpu.memory_space<vmem>>) attributes {dimension_semantics = [#tpu.dimension_semantics<parallel>], iteration_bounds = array<i64: 1>, scalar_prefetch = 0 : i64, scratch_operands = 0 : i64, tpu.core_type = #tpu.core_type<tc>, window_params = [{transform_indices = @transform_0, window_bounds = array<i64: 8, 32>}, {pipeline_mode = #tpu.pipeline_mode<synchronous>, transform_indices = @transform_1, window_bounds = array<i64: 32, 640>}, {pipeline_mode = #tpu.pipeline_mode<synchronous>, transform_indices = @transform_2, window_bounds = array<i64: 640, 512>}, {pipeline_mode = #tpu.pipeline_mode<synchronous>, transform_indices = @transform_3, window_bounds = array<i64: 512, 256>}, {pipeline_mode = #tpu.pipeline_mode<synchronous>, transform_indices = @transform_4, window_bounds = array<i64: 256, 128>}, {pipeline_mode = #tpu.pipeline_mode<synchronous>, transform_indices = @transform_5, window_bounds = array<i64: 8, 640>}, {transform_indices = @transform_6, window_bounds = array<i64: 8, 128>}]} {
    %c0 = arith.constant 0 : index
    %c0_0 = arith.constant 0 : index
    %0 = vector.load %arg1[%c0, %c0_0] : memref<8x32xbf16, #tpu.memory_space<vmem>>, vector<8x32xbf16>
    %c0_1 = arith.constant 0 : index
    %c0_2 = arith.constant 0 : index
    %1 = vector.load %arg6[%c0_1, %c0_2] : memref<8x640xf32, #tpu.memory_space<vmem>>, vector<1x640xf32>
    %c0_3 = arith.constant 0 : index
    %c0_4 = arith.constant 0 : index
    %2 = vector.load %arg2[%c0_3, %c0_4] : memref<32x640xbf16, #tpu.memory_space<vmem>>, vector<32x640xbf16>
    %cst = arith.constant dense<0.000000e+00> : vector<8x640xf32>
    %3 = tpu.matmul %0, %2, %cst {dimension_numbers = #tpu.dot_dimension_numbers<[1], [0], [0], [1], [0, 0, 1, 1], [], []>} : vector<8x32xbf16>, vector<32x640xbf16>, vector<8x640xf32> -> vector<8x640xf32>
    %4 = vector.broadcast %1 : vector<1x640xf32> to vector<8x640xf32>
    %5 = arith.addf %3, %4 : vector<8x640xf32>
    %c1 = arith.constant 1 : index
    %c0_5 = arith.constant 0 : index
    %6 = vector.load %arg6[%c1, %c0_5] : memref<8x640xf32, #tpu.memory_space<vmem>>, vector<1x512xf32>
    %7 = arith.truncf %5 : vector<8x640xf32> to vector<8x640xbf16>
    %c0_6 = arith.constant 0 : index
    %c0_7 = arith.constant 0 : index
    %8 = vector.load %arg3[%c0_6, %c0_7] : memref<640x512xbf16, #tpu.memory_space<vmem>>, vector<640x512xbf16>
    %cst_8 = arith.constant dense<0.000000e+00> : vector<8x512xf32>
    %9 = tpu.matmul %7, %8, %cst_8 {dimension_numbers = #tpu.dot_dimension_numbers<[1], [0], [0], [1], [0, 0, 1, 1], [], []>} : vector<8x640xbf16>, vector<640x512xbf16>, vector<8x512xf32> -> vector<8x512xf32>
    %10 = vector.broadcast %6 : vector<1x512xf32> to vector<8x512xf32>
    %11 = arith.addf %9, %10 : vector<8x512xf32>
    %c2 = arith.constant 2 : index
    %c0_9 = arith.constant 0 : index
    %12 = vector.load %arg6[%c2, %c0_9] : memref<8x640xf32, #tpu.memory_space<vmem>>, vector<1x256xf32>
    %13 = arith.truncf %11 : vector<8x512xf32> to vector<8x512xbf16>
    %c0_10 = arith.constant 0 : index
    %c0_11 = arith.constant 0 : index
    %14 = vector.load %arg4[%c0_10, %c0_11] : memref<512x256xbf16, #tpu.memory_space<vmem>>, vector<512x256xbf16>
    %cst_12 = arith.constant dense<0.000000e+00> : vector<8x256xf32>
    %15 = tpu.matmul %13, %14, %cst_12 {dimension_numbers = #tpu.dot_dimension_numbers<[1], [0], [0], [1], [0, 0, 1, 1], [], []>} : vector<8x512xbf16>, vector<512x256xbf16>, vector<8x256xf32> -> vector<8x256xf32>
    %16 = vector.broadcast %12 : vector<1x256xf32> to vector<8x256xf32>
    %17 = arith.addf %15, %16 : vector<8x256xf32>
    %c3 = arith.constant 3 : index
    %c0_13 = arith.constant 0 : index
    %18 = vector.load %arg6[%c3, %c0_13] : memref<8x640xf32, #tpu.memory_space<vmem>>, vector<1x128xf32>
    %19 = arith.truncf %17 : vector<8x256xf32> to vector<8x256xbf16>
    %c0_14 = arith.constant 0 : index
    %c0_15 = arith.constant 0 : index
    %20 = vector.load %arg5[%c0_14, %c0_15] : memref<256x128xbf16, #tpu.memory_space<vmem>>, vector<256x128xbf16>
    %cst_16 = arith.constant dense<0.000000e+00> : vector<8x128xf32>
    %21 = tpu.matmul %19, %20, %cst_16 {dimension_numbers = #tpu.dot_dimension_numbers<[1], [0], [0], [1], [0, 0, 1, 1], [], []>} : vector<8x256xbf16>, vector<256x128xbf16>, vector<8x128xf32> -> vector<8x128xf32>
    %22 = vector.broadcast %18 : vector<1x128xf32> to vector<8x128xf32>
    %23 = arith.addf %21, %22 : vector<8x128xf32>
    %24 = arith.negf %23 : vector<8x128xf32>
    %25 = math.exp %24 : vector<8x128xf32>
    %cst_17 = arith.constant 1.000000e+00 : f32
    %26 = vector.broadcast %cst_17 : f32 to vector<8x128xf32>
    %27 = arith.addf %26, %25 : vector<8x128xf32>
    %28 = arith.divf %26, %27 : vector<8x128xf32>
    %c0_18 = arith.constant 0 : index
    %c0_19 = arith.constant 0 : index
    %29 = vector.load %arg7[%c0_18, %c0_19] : memref<8x128xf32, #tpu.memory_space<vmem>>, vector<8x128xf32>
    tpu.vector_store %arg7[%c0_18, %c0_19], %28 {strides = array<i32>} : memref<8x128xf32, #tpu.memory_space<vmem>>, vector<8x128xf32>,
    return
  }
  func.func @transform_0(%arg0: i32) -> (i32, i32) {
    %c0_i32 = arith.constant 0 : i32
    %c0_i32_0 = arith.constant 0 : i32
    return %arg0, %c0_i32 : i32, i32
  }
  func.func @transform_1(%arg0: i32) -> (i32, i32) {
    %c0_i32 = arith.constant 0 : i32
    %c0_i32_0 = arith.constant 0 : i32
    %c0_i32_1 = arith.constant 0 : i32
    return %c0_i32, %c0_i32_0 : i32, i32
  }
  func.func @transform_2(%arg0: i32) -> (i32, i32) {
    %c0_i32 = arith.constant 0 : i32
    %c0_i32_0 = arith.constant 0 : i32
    %c0_i32_1 = arith.constant 0 : i32
    return %c0_i32, %c0_i32_0 : i32, i32
  }
  func.func @transform_3(%arg0: i32) -> (i32, i32) {
    %c0_i32 = arith.constant 0 : i32
    %c0_i32_0 = arith.constant 0 : i32
    %c0_i32_1 = arith.constant 0 : i32
    return %c0_i32, %c0_i32_0 : i32, i32
  }
  func.func @transform_4(%arg0: i32) -> (i32, i32) {
    %c0_i32 = arith.constant 0 : i32
    %c0_i32_0 = arith.constant 0 : i32
    %c0_i32_1 = arith.constant 0 : i32
    return %c0_i32, %c0_i32_0 : i32, i32
  }
  func.func @transform_5(%arg0: i32) -> (i32, i32) {
    %c0_i32 = arith.constant 0 : i32
    %c0_i32_0 = arith.constant 0 : i32
    %c0_i32_1 = arith.constant 0 : i32
    return %c0_i32, %c0_i32_0 : i32, i32
  }
  func.func @transform_6(%arg0: i32) -> (i32, i32) {
    %c0_i32 = arith.constant 0 : i32
    %c0_i32_0 = arith.constant 0 : i32
    return %arg0, %c0_i32 : i32, i32
  }
}

</mosaic_0001>

<llo_original>
// kernel: _lambda_.1
$region0: #{_lambda_.1}
  #allocation0 [shape = 'u32[]', space=smem, size = 0x4, offset = 0x4, fixed_abs, tag = 'smem constant byte address 0x4 - core index']
  #allocation1 [shape = 'u32[144,128]{1,0:T(1,128)}', space=vmem, size = 0x12000, scoped, tag = 'internal scratch']
  %s0 = inlined_call_operand.vmem [shape: bf16[8,32], index: 0, kind: input, shape index: {}]
  %s1 = inlined_call_operand.hbm [shape: bf16[32,640], index: 1, kind: input, shape index: {}]
  %s2 = inlined_call_operand.hbm [shape: bf16[640,512], index: 2, kind: input, shape index: {}]
  %s3 = inlined_call_operand.hbm [shape: bf16[512,256], index: 3, kind: input, shape index: {}]
  %s4 = inlined_call_operand.hbm [shape: bf16[256,128], index: 4, kind: input, shape index: {}]
  %s5 = inlined_call_operand.hbm [shape: f32[8,640], index: 5, kind: input, shape index: {}]
  %s6 = inlined_call_operand.vmem [shape: f32[8,128], index: 6, kind: output, shape index: {}]
  %s7 = sld [smem:[#allocation0]]
  $region54: #{_lambda_.1} parent=0
    _
  %s9 = ssub.s32 1, %s7
  %s10 = scalar_select 0, %s9, %s7
  $region1: #{_lambda_.1} parent=0
    #allocation2 [shape = 'u8[40960]{0}', space=vmem, size = 0xa000, scoped, tag = 'input window, operand 1, single buffered']
    #allocation3 [shape = 's32[1]{0}', space=sflag, size = 0x4, scoped, tag = 'scoped memory for _lambda_.1']
    #allocation4 [shape = 'u8[655360]{0}', space=vmem, size = 0xa0000, scoped, tag = 'input window, operand 2, single buffered']
    #allocation5 [shape = 's32[1]{0}', space=sflag, size = 0x4, scoped, tag = 'scoped memory for _lambda_.1']
    #allocation6 [shape = 'u8[262144]{0}', space=vmem, size = 0x40000, scoped, tag = 'input window, operand 3, single buffered']
    #allocation7 [shape = 'u8[65536]{0}', space=vmem, size = 0x10000, scoped, tag = 'input window, operand 4, single buffered']
    #allocation8 [shape = 's32[1]{0}', space=sflag, size = 0x4, scoped, tag = 'scoped memory for _lambda_.1']
    #allocation9 [shape = 'u8[20480]{0}', space=vmem, size = 0x5000, scoped, tag = 'input window, operand 5, single buffered']
    %11 = vsyncpa [#allocation3], 0
    %12 = vsyncpa [#allocation5], 0
    %13 = vsyncpa [#allocation8], 0
    // Predicated region
    $region2: #{_lambda_.1} parent=1 // pred_check
      _
    $region3: #{_lambda_.1} parent=1 // pred_check_branch
      %15 = sbr.rel (0) target = $region5
    $region4: #{_lambda_.1} parent=1 // pred_region
      _
    $region5: #{_lambda_.1} parent=1 // pred_fallthru
      _
    // Predicated region
    $region6: #{_lambda_.1} parent=1 // pred_check
      _
    $region7: #{_lambda_.1} parent=1 // pred_check_branch
      %17 = sbr.rel (0) target = $region9
    $region8: #{_lambda_.1} parent=1 // pred_region
      %s19 = ssub.s32 1280, 1280
      %20 = vsyncadd [#allocation3], %s19
      %s21 = sshll.u32 [#allocation2], 4
      %s22 = int_to_ptr.vmem [resolvable:$true] %s21
      %27 = dma.hbm_to_vmem [thread:$0]  %s1, 1280, %s22, [#allocation3], 320, 320, 20
    $region9: #{_lambda_.1} parent=1 // pred_fallthru
      _
    // Predicated region
    $region10: #{_lambda_.1} parent=1 // pred_check
      _
    $region11: #{_lambda_.1} parent=1 // pred_check_branch
      %29 = sbr.rel (0) target = $region13
    $region12: #{_lambda_.1} parent=1 // pred_region
      %s31 = ssub.s32 20480, 20480
      %32 = vsyncadd [#allocation5], %s31
      %s33 = sshll.u32 [#allocation4], 4
      %s34 = int_to_ptr.vmem [resolvable:$true] %s33
      %39 = dma.hbm_to_vmem [thread:$0]  %s2, 20480, %s34, [#allocation5], 256, 256, 16
    $region13: #{_lambda_.1} parent=1 // pred_fallthru
      _
    // Predicated region
    $region14: #{_lambda_.1} parent=1 // pred_check
      _
    $region15: #{_lambda_.1} parent=1 // pred_check_branch
      %41 = sbr.rel (0) target = $region17
    $region16: #{_lambda_.1} parent=1 // pred_region
      %s43 = ssub.s32 8192, 8192
      %44 = vsyncadd [#allocation5], %s43
      %s45 = sshll.u32 [#allocation6], 4
      %s46 = int_to_ptr.vmem [resolvable:$true] %s45
      %51 = dma.hbm_to_vmem [thread:$0]  %s3, 8192, %s46, [#allocation5], 128, 128, 8
    $region17: #{_lambda_.1} parent=1 // pred_fallthru
      _
    // Predicated region
    $region18: #{_lambda_.1} parent=1 // pred_check
      _
    $region19: #{_lambda_.1} parent=1 // pred_check_branch
      %53 = sbr.rel (0) target = $region21
    $region20: #{_lambda_.1} parent=1 // pred_region
      %s55 = ssub.s32 2048, 2048
      %56 = vsyncadd [#allocation8], %s55
      %s57 = sshll.u32 [#allocation7], 4
      %s58 = int_to_ptr.vmem [resolvable:$true] %s57
      %63 = dma.hbm_to_vmem [thread:$0]  %s4, 2048, %s58, [#allocation8], 64, 64, 4
    $region21: #{_lambda_.1} parent=1 // pred_fallthru
      _
    // Predicated region
    $region22: #{_lambda_.1} parent=1 // pred_check
      _
    $region23: #{_lambda_.1} parent=1 // pred_check_branch
      %65 = sbr.rel (0) target = $region25
    $region24: #{_lambda_.1} parent=1 // pred_region
      %s67 = ssub.s32 640, 640
      %68 = vsyncadd [#allocation8], %s67
      %s70 = sshll.u32 [#allocation9], 4
      %s71 = int_to_ptr.vmem [resolvable:$true] %s70
      %73 = dma.hbm_to_vmem [thread:$0]  %s5, 640, %s71, [#allocation8]
    $region25: #{_lambda_.1} parent=1 // pred_fallthru
      _
    // Predicated region
    $region26: #{_lambda_.1} parent=1 // pred_check
      _
    $region27: #{_lambda_.1} parent=1 // pred_check_branch
      %75 = sbr.rel (0) target = $region29
    $region28: #{_lambda_.1} parent=1 // pred_region
      %76 = dma.done [#allocation3], 1280
    $region29: #{_lambda_.1} parent=1 // pred_fallthru
      _
    // Predicated region
    $region30: #{_lambda_.1} parent=1 // pred_check
      _
    $region31: #{_lambda_.1} parent=1 // pred_check_branch
      %78 = sbr.rel (0) target = $region33
    $region32: #{_lambda_.1} parent=1 // pred_region
      %79 = dma.done [#allocation5], 20480
    $region33: #{_lambda_.1} parent=1 // pred_fallthru
      _
    // Predicated region
    $region34: #{_lambda_.1} parent=1 // pred_check
      _
    $region35: #{_lambda_.1} parent=1 // pred_check_branch
      %81 = sbr.rel (0) target = $region37
    $region36: #{_lambda_.1} parent=1 // pred_region
      %82 = dma.done [#allocation5], 8192
    $region37: #{_lambda_.1} parent=1 // pred_fallthru
      _
    // Predicated region
    $region38: #{_lambda_.1} parent=1 // pred_check
      _
    $region39: #{_lambda_.1} parent=1 // pred_check_branch
      %84 = sbr.rel (0) target = $region41
    $region40: #{_lambda_.1} parent=1 // pred_region
      %85 = dma.done [#allocation8], 2048
    $region41: #{_lambda_.1} parent=1 // pred_fallthru
      _
    // Predicated region
    $region42: #{_lambda_.1} parent=1 // pred_check
      _
    $region43: #{_lambda_.1} parent=1 // pred_check_branch
      %87 = sbr.rel (0) target = $region45
    $region44: #{_lambda_.1} parent=1 // pred_region
      %88 = dma.done [#allocation8], 640
    $region45: #{_lambda_.1} parent=1 // pred_fallthru
      _
    %v90 = vld [vmem:[%s0] sm:$0xf]
    %v91 = vld [vmem:[#allocation9] ss:$8 sm:$0xf]
    %v92 = vld [vmem:[#allocation9] ss:$8 sm:$0x10]
    %v93 = vor.u32 %v91, %v92
    %v94 = vld [vmem:[#allocation2] sm:$0xff]
    %v95 = vld [vmem:[#allocation2 + $0x8] sm:$0xff]
    %v96 = vld [vmem:[#allocation2 + $0x10] sm:$0xf]
    %v97 = vld [vmem:[#allocation2 + $0x14] sm:$0xff]
    %v98 = vld [vmem:[#allocation2 + $0x1c] sm:$0xff]
    %v99 = vld [vmem:[#allocation2 + $0x24] sm:$0xf]
    %v100 = vld [vmem:[#allocation2 + $0x28] sm:$0xff]
    %v101 = vld [vmem:[#allocation2 + $0x30] sm:$0xff]
    %v102 = vld [vmem:[#allocation2 + $0x38] sm:$0xf]
    %v103 = vld [vmem:[#allocation2 + $0x3c] sm:$0xff]
    %v104 = vld [vmem:[#allocation2 + $0x44] sm:$0xff]
    %v105 = vld [vmem:[#allocation2 + $0x4c] sm:$0xf]
    %v107 = vlaneseq
    %v108 = vshrl.u32 %v107, 7
    %v109 = vsub.s32 0, %v108
    %v110 = vrot.slane %v93, %v109
    %v111 = vlaneseq
    %v112 = vshrl.u32 %v111, 7
    %v113 = vsub.s32 1, %v112
    %v114 = vrot.slane %v93, %v113
    %v115 = vlaneseq
    %v116 = vshrl.u32 %v115, 7
    %v117 = vsub.s32 2, %v116
    %v118 = vrot.slane %v93, %v117
    %v119 = vlaneseq
    %v120 = vshrl.u32 %v119, 7
    %v121 = vsub.s32 3, %v120
    %v122 = vrot.slane %v93, %v121
    %v123 = vlaneseq
    %v124 = vshrl.u32 %v123, 7
    %v125 = vsub.s32 4, %v124
    %v126 = vrot.slane %v93, %v125
    %v144 = vunpack.c.l.b16 %v94
    %v145 = vunpack.c.h.b16 %v94
    %v146 = vunpack.c.l.b16 %v95
    %v147 = vunpack.c.h.b16 %v95
    %v148 = vunpack.c.l.b16 %v96
    %v149 = vunpack.c.l.b16 %v97
    %v150 = vunpack.c.h.b16 %v97
    %v151 = vunpack.c.l.b16 %v98
    %v152 = vunpack.c.h.b16 %v98
    %v153 = vunpack.c.l.b16 %v99
    %v154 = vunpack.c.l.b16 %v100
    %v155 = vunpack.c.h.b16 %v100
    %v156 = vunpack.c.l.b16 %v101
    %v157 = vunpack.c.h.b16 %v101
    %v158 = vunpack.c.l.b16 %v102
    %v159 = vunpack.c.l.b16 %v103
    %v160 = vunpack.c.h.b16 %v103
    %v161 = vunpack.c.l.b16 %v104
    %v162 = vunpack.c.h.b16 %v104
    %v163 = vunpack.c.l.b16 %v105
    %v164 = vpack.c.b16 %v149, %v144
    %v165 = vpack.c.b16 %v150, %v145
    %v166 = vpack.c.b16 %v151, %v146
    %v167 = vpack.c.b16 %v152, %v147
    %v168 = vpack.c.b16 %v153, %v148
    %v169 = vpack.c.b16 %v159, %v154
    %v170 = vpack.c.b16 %v160, %v155
    %v171 = vpack.c.b16 %v161, %v156
    %v172 = vpack.c.b16 %v162, %v157
    %v173 = vpack.c.b16 %v163, %v158
    %vm184 = vcmask 261120
    %v186 = vsel %vm184, %v90, 0
    %188 = vmatprep.subr.bf16.mxu0 %v165
    %189 = vmatpush1.bf16.msra.mxu0 %v164
    %190 = vmatprep.subr.bf16.mxu0 %v170
    %191 = vmatpush1.bf16.msra.mxu0 %v169
    %192 = vmatprep.subr.bf16.mxu0 0
    %193 = vmatpush1.bf16.msra.mxu0 0
    %194 = vmatprep.subr.bf16.mxu0 0
    %195 = vmatpush1.bf16.msra.mxu0 0
    %196 = vmatprep.subr.bf16.mxu0 0
    %197 = vmatpush1.bf16.msra.mxu0 0
    %198 = vmatprep.subr.bf16.mxu0 0
    %199 = vmatpush1.bf16.msra.mxu0 0
    %200 = vmatprep.subr.bf16.mxu0 0
    %201 = vmatpush1.bf16.msra.mxu0 0
    %202 = vmatprep.subr.bf16.mxu0 0
    %203 = vmatpush1.bf16.msra.mxu0 0
    %204 = vmatprep.subr.bf16.mxu0 0
    %205 = vmatpush1.bf16.msra.mxu0 0
    %206 = vmatprep.subr.bf16.mxu0 0
    %207 = vmatpush1.bf16.msra.mxu0 0
    %208 = vmatprep.subr.bf16.mxu0 0
    %209 = vmatpush1.bf16.msra.mxu0 0
    %210 = vmatprep.subr.bf16.mxu0 0
    %211 = vmatpush1.bf16.msra.mxu0 0
    %212 = vmatprep.subr.bf16.mxu0 0
    %213 = vmatpush1.bf16.msra.mxu0 0
    %214 = vmatprep.subr.bf16.mxu0 0
    %215 = vmatpush1.bf16.msra.mxu0 0
    %216 = vmatprep.subr.bf16.mxu0 0
    %217 = vmatpush1.bf16.msra.mxu0 0
    %218 = vmatprep.subr.bf16.mxu0 0
    %219 = vmatpush1.bf16.msra.mxu0 0
    %220 = vmatprep.mubr.bf16.mxu0 0
    %221 = vmatmul.mubr.bf16.gmra.mrb[0].mxu0 %v186
    %v222 = vpop.f32.mrb[0].mxu0
    %v223 = vadd.f32 %v110, %v222
    %v224 = vpop.f32.mrb[0].mxu0
    %v225 = vadd.f32 %v114, %v224
    %v226 = vpop.f32.mrb[0].mxu0
    %v227 = vpop.f32.mrb[0].mxu0
    %228 = vdwg.mxu0
    %229 = vmatprep.subr.bf16.mxu0 %v167
    %230 = vmatpush1.bf16.msra.mxu0 %v166
    %231 = vmatprep.subr.bf16.mxu0 %v172
    %232 = vmatpush1.bf16.msra.mxu0 %v171
    %233 = vmatprep.subr.bf16.mxu0 0
    %234 = vmatpush1.bf16.msra.mxu0 0
    %235 = vmatprep.subr.bf16.mxu0 0
    %236 = vmatpush1.bf16.msra.mxu0 0
    %237 = vmatprep.subr.bf16.mxu0 0
    %238 = vmatpush1.bf16.msra.mxu0 0
    %239 = vmatprep.subr.bf16.mxu0 0
    %240 = vmatpush1.bf16.msra.mxu0 0
    %241 = vmatprep.subr.bf16.mxu0 0
    %242 = vmatpush1.bf16.msra.mxu0 0
    %243 = vmatprep.subr.bf16.mxu0 0
    %244 = vmatpush1.bf16.msra.mxu0 0
    %245 = vmatprep.subr.bf16.mxu0 0
    %246 = vmatpush1.bf16.msra.mxu0 0
    %247 = vmatprep.subr.bf16.mxu0 0
    %248 = vmatpush1.bf16.msra.mxu0 0
    %249 = vmatprep.subr.bf16.mxu0 0
    %250 = vmatpush1.bf16.msra.mxu0 0
    %251 = vmatprep.subr.bf16.mxu0 0
    %252 = vmatpush1.bf16.msra.mxu0 0
    %253 = vmatprep.subr.bf16.mxu0 0
    %254 = vmatpush1.bf16.msra.mxu0 0
    %255 = vmatprep.subr.bf16.mxu0 0
    %256 = vmatpush1.bf16.msra.mxu0 0
    %257 = vmatprep.subr.bf16.mxu0 0
    %258 = vmatpush1.bf16.msra.mxu0 0
    %259 = vmatprep.subr.bf16.mxu0 0
    %260 = vmatpush1.bf16.msra.mxu0 0
    %261 = vmatprep.mubr.bf16.mxu0 0
    %262 = vmatmul.mubr.bf16.gmra.mrb[0].mxu0 %v186
    %v263 = vpop.f32.mrb[0].mxu0
    %v264 = vadd.f32 %v118, %v263
    %v265 = vpop.f32.mrb[0].mxu0
    %v266 = vadd.f32 %v122, %v265
    %v267 = vpop.f32.mrb[0].mxu0
    %v268 = vpop.f32.mrb[0].mxu0
    %269 = vdwg.mxu0
    %270 = vmatprep.subr.bf16.mxu0 0
    %271 = vmatpush1.bf16.msra.mxu0 %v168
    %272 = vmatprep.subr.bf16.mxu0 0
    %273 = vmatpush1.bf16.msra.mxu0 %v173
    %274 = vmatprep.subr.bf16.mxu0 0
    %275 = vmatpush1.bf16.msra.mxu0 0
    %276 = vmatprep.subr.bf16.mxu0 0
    %277 = vmatpush1.bf16.msra.mxu0 0
    %278 = vmatprep.subr.bf16.mxu0 0
    %279 = vmatpush1.bf16.msra.mxu0 0
    %280 = vmatprep.subr.bf16.mxu0 0
    %281 = vmatpush1.bf16.msra.mxu0 0
    %282 = vmatprep.subr.bf16.mxu0 0
    %283 = vmatpush1.bf16.msra.mxu0 0
    %284 = vmatprep.subr.bf16.mxu0 0
    %285 = vmatpush1.bf16.msra.mxu0 0
    %286 = vmatprep.subr.bf16.mxu0 0
    %287 = vmatpush1.bf16.msra.mxu0 0
    %288 = vmatprep.subr.bf16.mxu0 0
    %289 = vmatpush1.bf16.msra.mxu0 0
    %290 = vmatprep.subr.bf16.mxu0 0
    %291 = vmatpush1.bf16.msra.mxu0 0
    %292 = vmatprep.subr.bf16.mxu0 0
    %293 = vmatpush1.bf16.msra.mxu0 0
    %294 = vmatprep.subr.bf16.mxu0 0
    %295 = vmatpush1.bf16.msra.mxu0 0
    %296 = vmatprep.subr.bf16.mxu0 0
    %297 = vmatpush1.bf16.msra.mxu0 0
    %298 = vmatprep.subr.bf16.mxu0 0
    %299 = vmatpush1.bf16.msra.mxu0 0
    %300 = vmatprep.subr.bf16.mxu0 0
    %301 = vmatpush1.bf16.msra.mxu0 0
    %302 = vmatprep.mubr.bf16.mxu0 0
    %303 = vmatmul.mubr.bf16.gmra.mrb[0].mxu0 %v186
    %v304 = vpop.f32.mrb[0].mxu0
    %v305 = vadd.f32 %v126, %v304
    %v306 = vpop.f32.mrb[0].mxu0
    %v307 = vpop.f32.mrb[0].mxu0
    %v308 = vpop.f32.mrb[0].mxu0
    %309 = vdwg.mxu0
    %s310 = scalar_lea.vmem [#allocation9], 1
    %v311 = vld [vmem:[%s310] ss:$8 sm:$0xf]
    %v312 = vpack.c.bf16 %v223, %v223
    %v313 = vpack.c.bf16 %v225, %v225
    %v314 = vpack.c.bf16 %v264, %v264
    %v315 = vpack.c.bf16 %v266, %v266
    %v316 = vpack.c.bf16 %v305, %v305
    %v317 = vld [vmem:[#allocation4] sm:$0xff]
    %v318 = vld [vmem:[#allocation4 + $0x8] sm:$0xff]
    %v319 = vld [vmem:[#allocation4 + $0x10] sm:$0xff]
    %v320 = vld [vmem:[#allocation4 + $0x18] sm:$0xff]
    %v321 = vld [vmem:[#allocation4 + $0x20] sm:$0xff]
    %v322 = vld [vmem:[#allocation4 + $0x28] sm:$0xff]
    %v323 = vld [vmem:[#allocation4 + $0x30] sm:$0xff]
    %v324 = vld [vmem:[#allocation4 + $0x38] sm:$0xff]
    %v325 = vld [vmem:[#allocation4 + $0x40] sm:$0xff]
    %v326 = vld [vmem:[#allocation4 + $0x48] sm:$0xff]
    %v327 = vld [vmem:[#allocation4 + $0x50] sm:$0xff]
    %v328 = vld [vmem:[#allocation4 + $0x58] sm:$0xff]
    %v329 = vld [vmem:[#allocation4 + $0x60] sm:$0xff]
    %v330 = vld [vmem:[#allocation4 + $0x68] sm:$0xff]
    %v331 = vld [vmem:[#allocation4 + $0x70] sm:$0xff]
    %v332 = vld [vmem:[#allocation4 + $0x78] sm:$0xff]
    %v333 = vld [vmem:[#allocation4 + $0x80] sm:$0xff]
    %v334 = vld [vmem:[#allocation4 + $0x88] sm:$0xff]
    %v335 = vld [vmem:[#allocation4 + $0x90] sm:$0xff]
    %v336 = vld [vmem:[#allocation4 + $0x98] sm:$0xff]
    %v337 = vld [vmem:[#allocation4 + $0xa0] sm:$0xff]
    %v338 = vld [vmem:[#allocation4 + $0xa8] sm:$0xff]
    %v339 = vld [vmem:[#allocation4 + $0xb0] sm:$0xff]
    %v340 = vld [vmem:[#allocation4 + $0xb8] sm:$0xff]
    %v341 = vld [vmem:[#allocation4 + $0xc0] sm:$0xff]
    %v342 = vld [vmem:[#allocation4 + $0xc8] sm:$0xff]
    %v343 = vld [vmem:[#allocation4 + $0xd0] sm:$0xff]
    %v344 = vld [vmem:[#allocation4 + $0xd8] sm:$0xff]
    %v345 = vld [vmem:[#allocation4 + $0xe0] sm:$0xff]
    %v346 = vld [vmem:[#allocation4 + $0xe8] sm:$0xff]
    %v347 = vld [vmem:[#allocation4 + $0xf0] sm:$0xff]
    %v348 = vld [vmem:[#allocation4 + $0xf8] sm:$0xff]
    %v349 = vld [vmem:[#allocation4 + $0x100] sm:$0xff]
    %v350 = vld [vmem:[#allocation4 + $0x108] sm:$0xff]
    %v351 = vld [vmem:[#allocation4 + $0x110] sm:$0xff]
    %v352 = vld [vmem:[#allocation4 + $0x118] sm:$0xff]
    %v353 = vld [vmem:[#allocation4 + $0x120] sm:$0xff]
    %v354 = vld [vmem:[#allocation4 + $0x128] sm:$0xff]
    %v355 = vld [vmem:[#allocation4 + $0x130] sm:$0xff]
    %v356 = vld [vmem:[#allocation4 + $0x138] sm:$0xff]
    %v357 = vld [vmem:[#allocation4 + $0x140] sm:$0xff]
    %v358 = vld [vmem:[#allocation4 + $0x148] sm:$0xff]
    %v359 = vld [vmem:[#allocation4 + $0x150] sm:$0xff]
    %v360 = vld [vmem:[#allocation4 + $0x158] sm:$0xff]
    %v361 = vld [vmem:[#allocation4 + $0x160] sm:$0xff]
    %v362 = vld [vmem:[#allocation4 + $0x168] sm:$0xff]
    %v363 = vld [vmem:[#allocation4 + $0x170] sm:$0xff]
    %v364 = vld [vmem:[#allocation4 + $0x178] sm:$0xff]
    %v365 = vld [vmem:[#allocation4 + $0x180] sm:$0xff]
    %v366 = vld [vmem:[#allocation4 + $0x188] sm:$0xff]
    %v367 = vld [vmem:[#allocation4 + $0x190] sm:$0xff]
    %v368 = vld [vmem:[#allocation4 + $0x198] sm:$0xff]
    %v369 = vld [vmem:[#allocation4 + $0x1a0] sm:$0xff]
    %v370 = vld [vmem:[#allocation4 + $0x1a8] sm:$0xff]
    %v371 = vld [vmem:[#allocation4 + $0x1b0] sm:$0xff]
    %v372 = vld [vmem:[#allocation4 + $0x1b8] sm:$0xff]
    %v373 = vld [vmem:[#allocation4 + $0x1c0] sm:$0xff]
    %v374 = vld [vmem:[#allocation4 + $0x1c8] sm:$0xff]
    %v375 = vld [vmem:[#allocation4 + $0x1d0] sm:$0xff]
    %v376 = vld [vmem:[#allocation4 + $0x1d8] sm:$0xff]
    %v377 = vld [vmem:[#allocation4 + $0x1e0] sm:$0xff]
    %v378 = vld [vmem:[#allocation4 + $0x1e8] sm:$0xff]
    %v379 = vld [vmem:[#allocation4 + $0x1f0] sm:$0xff]
    %v380 = vld [vmem:[#allocation4 + $0x1f8] sm:$0xff]
    %v381 = vld [vmem:[#allocation4 + $0x200] sm:$0xff]
    %v382 = vld [vmem:[#allocation4 + $0x208] sm:$0xff]
    %v383 = vld [vmem:[#allocation4 + $0x210] sm:$0xff]
    %v384 = vld [vmem:[#allocation4 + $0x218] sm:$0xff]
    %v385 = vld [vmem:[#allocation4 + $0x220] sm:$0xff]
    %v386 = vld [vmem:[#allocation4 + $0x228] sm:$0xff]
    %v387 = vld [vmem:[#allocation4 + $0x230] sm:$0xff]
    %v388 = vld [vmem:[#allocation4 + $0x238] sm:$0xff]
    %v389 = vld [vmem:[#allocation4 + $0x240] sm:$0xff]
    %v390 = vld [vmem:[#allocation4 + $0x248] sm:$0xff]
    %v391 = vld [vmem:[#allocation4 + $0x250] sm:$0xff]
    %v392 = vld [vmem:[#allocation4 + $0x258] sm:$0xff]
    %v393 = vld [vmem:[#allocation4 + $0x260] sm:$0xff]
    %v394 = vld [vmem:[#allocation4 + $0x268] sm:$0xff]
    %v395 = vld [vmem:[#allocation4 + $0x270] sm:$0xff]
    %v396 = vld [vmem:[#allocation4 + $0x278] sm:$0xff]
    %v397 = vld [vmem:[#allocation4 + $0x280] sm:$0xff]
    %v398 = vld [vmem:[#allocation4 + $0x288] sm:$0xff]
    %v399 = vld [vmem:[#allocation4 + $0x290] sm:$0xff]
    %v400 = vld [vmem:[#allocation4 + $0x298] sm:$0xff]
    %v401 = vld [vmem:[#allocation4 + $0x2a0] sm:$0xff]
    %v402 = vld [vmem:[#allocation4 + $0x2a8] sm:$0xff]
    %v403 = vld [vmem:[#allocation4 + $0x2b0] sm:$0xff]
    %v404 = vld [vmem:[#allocation4 + $0x2b8] sm:$0xff]
    %v405 = vld [vmem:[#allocation4 + $0x2c0] sm:$0xff]
    %v406 = vld [vmem:[#allocation4 + $0x2c8] sm:$0xff]
    %v407 = vld [vmem:[#allocation4 + $0x2d0] sm:$0xff]
    %v408 = vld [vmem:[#allocation4 + $0x2d8] sm:$0xff]
    %v409 = vld [vmem:[#allocation4 + $0x2e0] sm:$0xff]
    %v410 = vld [vmem:[#allocation4 + $0x2e8] sm:$0xff]
    %v411 = vld [vmem:[#allocation4 + $0x2f0] sm:$0xff]
    %v412 = vld [vmem:[#allocation4 + $0x2f8] sm:$0xff]
    %v413 = vld [vmem:[#allocation4 + $0x300] sm:$0xff]
    %v414 = vld [vmem:[#allocation4 + $0x308] sm:$0xff]
    %v415 = vld [vmem:[#allocation4 + $0x310] sm:$0xff]
    %v416 = vld [vmem:[#allocation4 + $0x318] sm:$0xff]
    %v417 = vld [vmem:[#allocation4 + $0x320] sm:$0xff]
    %v418 = vld [vmem:[#allocation4 + $0x328] sm:$0xff]
    %v419 = vld [vmem:[#allocation4 + $0x330] sm:$0xff]
    %v420 = vld [vmem:[#allocation4 + $0x338] sm:$0xff]
    %v421 = vld [vmem:[#allocation4 + $0x340] sm:$0xff]
    %v422 = vld [vmem:[#allocation4 + $0x348] sm:$0xff]
    %v423 = vld [vmem:[#allocation4 + $0x350] sm:$0xff]
    %v424 = vld [vmem:[#allocation4 + $0x358] sm:$0xff]
    %v425 = vld [vmem:[#allocation4 + $0x360] sm:$0xff]
    %v426 = vld [vmem:[#allocation4 + $0x368] sm:$0xff]
    %v427 = vld [vmem:[#allocation4 + $0x370] sm:$0xff]
    %v428 = vld [vmem:[#allocation4 + $0x378] sm:$0xff]
    %v429 = vld [vmem:[#allocation4 + $0x380] sm:$0xff]
    %v430 = vld [vmem:[#allocation4 + $0x388] sm:$0xff]
    %v431 = vld [vmem:[#allocation4 + $0x390] sm:$0xff]
    %v432 = vld [vmem:[#allocation4 + $0x398] sm:$0xff]
    %v433 = vld [vmem:[#allocation4 + $0x3a0] sm:$0xff]
    %v434 = vld [vmem:[#allocation4 + $0x3a8] sm:$0xff]
    %v435 = vld [vmem:[#allocation4 + $0x3b0] sm:$0xff]
    %v436 = vld [vmem:[#allocation4 + $0x3b8] sm:$0xff]
    %v437 = vld [vmem:[#allocation4 + $0x3c0] sm:$0xff]
    %v438 = vld [vmem:[#allocation4 + $0x3c8] sm:$0xff]
    %v439 = vld [vmem:[#allocation4 + $0x3d0] sm:$0xff]
    %v440 = vld [vmem:[#allocation4 + $0x3d8] sm:$0xff]
    %v441 = vld [vmem:[#allocation4 + $0x3e0] sm:$0xff]
    %v442 = vld [vmem:[#allocation4 + $0x3e8] sm:$0xff]
    %v443 = vld [vmem:[#allocation4 + $0x3f0] sm:$0xff]
    %v444 = vld [vmem:[#allocation4 + $0x3f8] sm:$0xff]
    %v445 = vld [vmem:[#allocation4 + $0x400] sm:$0xff]
    %v446 = vld [vmem:[#allocation4 + $0x408] sm:$0xff]
    %v447 = vld [vmem:[#allocation4 + $0x410] sm:$0xff]
    %v448 = vld [vmem:[#allocation4 + $0x418] sm:$0xff]
    %v449 = vld [vmem:[#allocation4 + $0x420] sm:$0xff]
    %v450 = vld [vmem:[#allocation4 + $0x428] sm:$0xff]
    %v451 = vld [vmem:[#allocation4 + $0x430] sm:$0xff]
    %v452 = vld [vmem:[#allocation4 + $0x438] sm:$0xff]
    %v453 = vld [vmem:[#allocation4 + $0x440] sm:$0xff]
    %v454 = vld [vmem:[#allocation4 + $0x448] sm:$0xff]
    %v455 = vld [vmem:[#allocation4 + $0x450] sm:$0xff]
    %v456 = vld [vmem:[#allocation4 + $0x458] sm:$0xff]
    %v457 = vld [vmem:[#allocation4 + $0x460] sm:$0xff]
    %v458 = vld [vmem:[#allocation4 + $0x468] sm:$0xff]
    %v459 = vld [vmem:[#allocation4 + $0x470] sm:$0xff]
    %v460 = vld [vmem:[#allocation4 + $0x478] sm:$0xff]
    %v461 = vld [vmem:[#allocation4 + $0x480] sm:$0xff]
    %v462 = vld [vmem:[#allocation4 + $0x488] sm:$0xff]
    %v463 = vld [vmem:[#allocation4 + $0x490] sm:$0xff]
    %v464 = vld [vmem:[#allocation4 + $0x498] sm:$0xff]
    %v465 = vld [vmem:[#allocation4 + $0x4a0] sm:$0xff]
    %v466 = vld [vmem:[#allocation4 + $0x4a8] sm:$0xff]
    %v467 = vld [vmem:[#allocation4 + $0x4b0] sm:$0xff]
    %v468 = vld [vmem:[#allocation4 + $0x4b8] sm:$0xff]
    %v469 = vld [vmem:[#allocation4 + $0x4c0] sm:$0xff]
    %v470 = vld [vmem:[#allocation4 + $0x4c8] sm:$0xff]
    %v471 = vld [vmem:[#allocation4 + $0x4d0] sm:$0xff]
    %v472 = vld [vmem:[#allocation4 + $0x4d8] sm:$0xff]
    %v473 = vld [vmem:[#allocation4 + $0x4e0] sm:$0xff]
    %v474 = vld [vmem:[#allocation4 + $0x4e8] sm:$0xff]
    %v475 = vld [vmem:[#allocation4 + $0x4f0] sm:$0xff]
    %v476 = vld [vmem:[#allocation4 + $0x4f8] sm:$0xff]
    %v478 = vlaneseq
    %v479 = vshrl.u32 %v478, 7
    %v480 = vsub.s32 0, %v479
    %v481 = vrot.slane %v311, %v480
    %v482 = vlaneseq
    %v483 = vshrl.u32 %v482, 7
    %v484 = vsub.s32 1, %v483
    %v485 = vrot.slane %v311, %v484
    %v486 = vlaneseq
    %v487 = vshrl.u32 %v486, 7
    %v488 = vsub.s32 2, %v487
    %v489 = vrot.slane %v311, %v488
    %v490 = vlaneseq
    %v491 = vshrl.u32 %v490, 7
    %v492 = vsub.s32 3, %v491
    %v493 = vrot.slane %v311, %v492
    %v658 = vunpack.c.l.b16 %v317
    %v659 = vunpack.c.h.b16 %v317
    %v660 = vunpack.c.l.b16 %v318
    %v661 = vunpack.c.h.b16 %v318
    %v662 = vunpack.c.l.b16 %v319
    %v663 = vunpack.c.h.b16 %v319
    %v664 = vunpack.c.l.b16 %v320
    %v665 = vunpack.c.h.b16 %v320
    %v666 = vunpack.c.l.b16 %v321
    %v667 = vunpack.c.h.b16 %v321
    %v668 = vunpack.c.l.b16 %v322
    %v669 = vunpack.c.h.b16 %v322
    %v670 = vunpack.c.l.b16 %v323
    %v671 = vunpack.c.h.b16 %v323
    %v672 = vunpack.c.l.b16 %v324
    %v673 = vunpack.c.h.b16 %v324
    %v674 = vunpack.c.l.b16 %v325
    %v675 = vunpack.c.h.b16 %v325
    %v676 = vunpack.c.l.b16 %v326
    %v677 = vunpack.c.h.b16 %v326
    %v678 = vunpack.c.l.b16 %v327
    %v679 = vunpack.c.h.b16 %v327
    %v680 = vunpack.c.l.b16 %v328
    %v681 = vunpack.c.h.b16 %v328
    %v682 = vunpack.c.l.b16 %v329
    %v683 = vunpack.c.h.b16 %v329
    %v684 = vunpack.c.l.b16 %v330
    %v685 = vunpack.c.h.b16 %v330
    %v686 = vunpack.c.l.b16 %v331
    %v687 = vunpack.c.h.b16 %v331
    %v688 = vunpack.c.l.b16 %v332
    %v689 = vunpack.c.h.b16 %v332
    %v690 = vunpack.c.l.b16 %v333
    %v691 = vunpack.c.h.b16 %v333
    %v692 = vunpack.c.l.b16 %v334
    %v693 = vunpack.c.h.b16 %v334
    %v694 = vunpack.c.l.b16 %v335
    %v695 = vunpack.c.h.b16 %v335
    %v696 = vunpack.c.l.b16 %v336
    %v697 = vunpack.c.h.b16 %v336
    %v698 = vunpack.c.l.b16 %v337
    %v699 = vunpack.c.h.b16 %v337
    %v700 = vunpack.c.l.b16 %v338
    %v701 = vunpack.c.h.b16 %v338
    %v702 = vunpack.c.l.b16 %v339
    %v703 = vunpack.c.h.b16 %v339
    %v704 = vunpack.c.l.b16 %v340
    %v705 = vunpack.c.h.b16 %v340
    %v706 = vunpack.c.l.b16 %v341
    %v707 = vunpack.c.h.b16 %v341
    %v708 = vunpack.c.l.b16 %v342
    %v709 = vunpack.c.h.b16 %v342
    %v710 = vunpack.c.l.b16 %v343
    %v711 = vunpack.c.h.b16 %v343
    %v712 = vunpack.c.l.b16 %v344
    %v713 = vunpack.c.h.b16 %v344
    %v714 = vunpack.c.l.b16 %v345
    %v715 = vunpack.c.h.b16 %v345
    %v716 = vunpack.c.l.b16 %v346
    %v717 = vunpack.c.h.b16 %v346
    %v718 = vunpack.c.l.b16 %v347
    %v719 = vunpack.c.h.b16 %v347
    %v720 = vunpack.c.l.b16 %v348
    %v721 = vunpack.c.h.b16 %v348
    %v722 = vunpack.c.l.b16 %v349
    %v723 = vunpack.c.h.b16 %v349
    %v724 = vunpack.c.l.b16 %v350
    %v725 = vunpack.c.h.b16 %v350
    %v726 = vunpack.c.l.b16 %v351
    %v727 = vunpack.c.h.b16 %v351
    %v728 = vunpack.c.l.b16 %v352
    %v729 = vunpack.c.h.b16 %v352
    %v730 = vunpack.c.l.b16 %v353
    %v731 = vunpack.c.h.b16 %v353
    %v732 = vunpack.c.l.b16 %v354
    %v733 = vunpack.c.h.b16 %v354
    %v734 = vunpack.c.l.b16 %v355
    %v735 = vunpack.c.h.b16 %v355
    %v736 = vunpack.c.l.b16 %v356
    %v737 = vunpack.c.h.b16 %v356
    %v738 = vunpack.c.l.b16 %v357
    %v739 = vunpack.c.h.b16 %v357
    %v740 = vunpack.c.l.b16 %v358
    %v741 = vunpack.c.h.b16 %v358
    %v742 = vunpack.c.l.b16 %v359
    %v743 = vunpack.c.h.b16 %v359
    %v744 = vunpack.c.l.b16 %v360
    %v745 = vunpack.c.h.b16 %v360
    %v746 = vunpack.c.l.b16 %v361
    %v747 = vunpack.c.h.b16 %v361
    %v748 = vunpack.c.l.b16 %v362
    %v749 = vunpack.c.h.b16 %v362
    %v750 = vunpack.c.l.b16 %v363
    %v751 = vunpack.c.h.b16 %v363
    %v752 = vunpack.c.l.b16 %v364
    %v753 = vunpack.c.h.b16 %v364
    %v754 = vunpack.c.l.b16 %v365
    %v755 = vunpack.c.h.b16 %v365
    %v756 = vunpack.c.l.b16 %v366
    %v757 = vunpack.c.h.b16 %v366
    %v758 = vunpack.c.l.b16 %v367
    %v759 = vunpack.c.h.b16 %v367
    %v760 = vunpack.c.l.b16 %v368
    %v761 = vunpack.c.h.b16 %v368
    %v762 = vunpack.c.l.b16 %v369
    %v763 = vunpack.c.h.b16 %v369
    %v764 = vunpack.c.l.b16 %v370
    %v765 = vunpack.c.h.b16 %v370
    %v766 = vunpack.c.l.b16 %v371
    %v767 = vunpack.c.h.b16 %v371
    %v768 = vunpack.c.l.b16 %v372
    %v769 = vunpack.c.h.b16 %v372
    %v770 = vunpack.c.l.b16 %v373
    %v771 = vunpack.c.h.b16 %v373
    %v772 = vunpack.c.l.b16 %v374
    %v773 = vunpack.c.h.b16 %v374
    %v774 = vunpack.c.l.b16 %v375
    %v775 = vunpack.c.h.b16 %v375
    %v776 = vunpack.c.l.b16 %v376
    %v777 = vunpack.c.h.b16 %v376
    %v778 = vunpack.c.l.b16 %v377
    %v779 = vunpack.c.h.b16 %v377
    %v780 = vunpack.c.l.b16 %v378
    %v781 = vunpack.c.h.b16 %v378
    %v782 = vunpack.c.l.b16 %v379
    %v783 = vunpack.c.h.b16 %v379
    %v784 = vunpack.c.l.b16 %v380
    %v785 = vunpack.c.h.b16 %v380
    %v786 = vunpack.c.l.b16 %v381
    %v787 = vunpack.c.h.b16 %v381
    %v788 = vunpack.c.l.b16 %v382
    %v789 = vunpack.c.h.b16 %v382
    %v790 = vunpack.c.l.b16 %v383
    %v791 = vunpack.c.h.b16 %v383
    %v792 = vunpack.c.l.b16 %v384
    %v793 = vunpack.c.h.b16 %v384
    %v794 = vunpack.c.l.b16 %v385
    %v795 = vunpack.c.h.b16 %v385
    %v796 = vunpack.c.l.b16 %v386
    %v797 = vunpack.c.h.b16 %v386
    %v798 = vunpack.c.l.b16 %v387
    %v799 = vunpack.c.h.b16 %v387
    %v800 = vunpack.c.l.b16 %v388
    %v801 = vunpack.c.h.b16 %v388
    %v802 = vunpack.c.l.b16 %v389
    %v803 = vunpack.c.h.b16 %v389
    %v804 = vunpack.c.l.b16 %v390
    %v805 = vunpack.c.h.b16 %v390
    %v806 = vunpack.c.l.b16 %v391
    %v807 = vunpack.c.h.b16 %v391
    %v808 = vunpack.c.l.b16 %v392
    %v809 = vunpack.c.h.b16 %v392
    %v810 = vunpack.c.l.b16 %v393
    %v811 = vunpack.c.h.b16 %v393
    %v812 = vunpack.c.l.b16 %v394
    %v813 = vunpack.c.h.b16 %v394
    %v814 = vunpack.c.l.b16 %v395
    %v815 = vunpack.c.h.b16 %v395
    %v816 = vunpack.c.l.b16 %v396
    %v817 = vunpack.c.h.b16 %v396
    %v818 = vunpack.c.l.b16 %v397
    %v819 = vunpack.c.h.b16 %v397
    %v820 = vunpack.c.l.b16 %v398
    %v821 = vunpack.c.h.b16 %v398
    %v822 = vunpack.c.l.b16 %v399
    %v823 = vunpack.c.h.b16 %v399
    %v824 = vunpack.c.l.b16 %v400
    %v825 = vunpack.c.h.b16 %v400
    %v826 = vunpack.c.l.b16 %v401
    %v827 = vunpack.c.h.b16 %v401
    %v828 = vunpack.c.l.b16 %v402
    %v829 = vunpack.c.h.b16 %v402
    %v830 = vunpack.c.l.b16 %v403
    %v831 = vunpack.c.h.b16 %v403
    %v832 = vunpack.c.l.b16 %v404
    %v833 = vunpack.c.h.b16 %v404
    %v834 = vunpack.c.l.b16 %v405
    %v835 = vunpack.c.h.b16 %v405
    %v836 = vunpack.c.l.b16 %v406
    %v837 = vunpack.c.h.b16 %v406
    %v838 = vunpack.c.l.b16 %v407
    %v839 = vunpack.c.h.b16 %v407
    %v840 = vunpack.c.l.b16 %v408
    %v841 = vunpack.c.h.b16 %v408
    %v842 = vunpack.c.l.b16 %v409
    %v843 = vunpack.c.h.b16 %v409
    %v844 = vunpack.c.l.b16 %v410
    %v845 = vunpack.c.h.b16 %v410
    %v846 = vunpack.c.l.b16 %v411
    %v847 = vunpack.c.h.b16 %v411
    %v848 = vunpack.c.l.b16 %v412
    %v849 = vunpack.c.h.b16 %v412
    %v850 = vunpack.c.l.b16 %v413
    %v851 = vunpack.c.h.b16 %v413
    %v852 = vunpack.c.l.b16 %v414
    %v853 = vunpack.c.h.b16 %v414
    %v854 = vunpack.c.l.b16 %v415
    %v855 = vunpack.c.h.b16 %v415
    %v856 = vunpack.c.l.b16 %v416
    %v857 = vunpack.c.h.b16 %v416
    %v858 = vunpack.c.l.b16 %v417
    %v859 = vunpack.c.h.b16 %v417
    %v860 = vunpack.c.l.b16 %v418
    %v861 = vunpack.c.h.b16 %v418
    %v862 = vunpack.c.l.b16 %v419
    %v863 = vunpack.c.h.b16 %v419
    %v864 = vunpack.c.l.b16 %v420
    %v865 = vunpack.c.h.b16 %v420
    %v866 = vunpack.c.l.b16 %v421
    %v867 = vunpack.c.h.b16 %v421
    %v868 = vunpack.c.l.b16 %v422
    %v869 = vunpack.c.h.b16 %v422
    %v870 = vunpack.c.l.b16 %v423
    %v871 = vunpack.c.h.b16 %v423
    %v872 = vunpack.c.l.b16 %v424
    %v873 = vunpack.c.h.b16 %v424
    %v874 = vunpack.c.l.b16 %v425
    %v875 = vunpack.c.h.b16 %v425
    %v876 = vunpack.c.l.b16 %v426
    %v877 = vunpack.c.h.b16 %v426
    %v878 = vunpack.c.l.b16 %v427
    %v879 = vunpack.c.h.b16 %v427
    %v880 = vunpack.c.l.b16 %v428
    %v881 = vunpack.c.h.b16 %v428
    %v882 = vunpack.c.l.b16 %v429
    %v883 = vunpack.c.h.b16 %v429
    %v884 = vunpack.c.l.b16 %v430
    %v885 = vunpack.c.h.b16 %v430
    %v886 = vunpack.c.l.b16 %v431
    %v887 = vunpack.c.h.b16 %v431
    %v888 = vunpack.c.l.b16 %v432
    %v889 = vunpack.c.h.b16 %v432
    %v890 = vunpack.c.l.b16 %v433
    %v891 = vunpack.c.h.b16 %v433
    %v892 = vunpack.c.l.b16 %v434
    %v893 = vunpack.c.h.b16 %v434
    %v894 = vunpack.c.l.b16 %v435
    %v895 = vunpack.c.h.b16 %v435
    %v896 = vunpack.c.l.b16 %v436
    %v897 = vunpack.c.h.b16 %v436
    %v898 = vunpack.c.l.b16 %v437
    %v899 = vunpack.c.h.b16 %v437
    %v900 = vunpack.c.l.b16 %v438
    %v901 = vunpack.c.h.b16 %v438
    %v902 = vunpack.c.l.b16 %v439
    %v903 = vunpack.c.h.b16 %v439
    %v904 = vunpack.c.l.b16 %v440
    %v905 = vunpack.c.h.b16 %v440
    %v906 = vunpack.c.l.b16 %v441
    %v907 = vunpack.c.h.b16 %v441
    %v908 = vunpack.c.l.b16 %v442
    %v909 = vunpack.c.h.b16 %v442
    %v910 = vunpack.c.l.b16 %v443
    %v911 = vunpack.c.h.b16 %v443
    %v912 = vunpack.c.l.b16 %v444
    %v913 = vunpack.c.h.b16 %v444
    %v914 = vunpack.c.l.b16 %v445
    %v915 = vunpack.c.h.b16 %v445
    %v916 = vunpack.c.l.b16 %v446
    %v917 = vunpack.c.h.b16 %v446
    %v918 = vunpack.c.l.b16 %v447
    %v919 = vunpack.c.h.b16 %v447
    %v920 = vunpack.c.l.b16 %v448
    %v921 = vunpack.c.h.b16 %v448
    %v922 = vunpack.c.l.b16 %v449
    %v923 = vunpack.c.h.b16 %v449
    %v924 = vunpack.c.l.b16 %v450
    %v925 = vunpack.c.h.b16 %v450
    %v926 = vunpack.c.l.b16 %v451
    %v927 = vunpack.c.h.b16 %v451
    %v928 = vunpack.c.l.b16 %v452
    %v929 = vunpack.c.h.b16 %v452
    %v930 = vunpack.c.l.b16 %v453
    %v931 = vunpack.c.h.b16 %v453
    %v932 = vunpack.c.l.b16 %v454
    %v933 = vunpack.c.h.b16 %v454
    %v934 = vunpack.c.l.b16 %v455
    %v935 = vunpack.c.h.b16 %v455
    %v936 = vunpack.c.l.b16 %v456
    %v937 = vunpack.c.h.b16 %v456
    %v938 = vunpack.c.l.b16 %v457
    %v939 = vunpack.c.h.b16 %v457
    %v940 = vunpack.c.l.b16 %v458
    %v941 = vunpack.c.h.b16 %v458
    %v942 = vunpack.c.l.b16 %v459
    %v943 = vunpack.c.h.b16 %v459
    %v944 = vunpack.c.l.b16 %v460
    %v945 = vunpack.c.h.b16 %v460
    %v946 = vunpack.c.l.b16 %v461
    %v947 = vunpack.c.h.b16 %v461
    %v948 = vunpack.c.l.b16 %v462
    %v949 = vunpack.c.h.b16 %v462
    %v950 = vunpack.c.l.b16 %v463
    %v951 = vunpack.c.h.b16 %v463
    %v952 = vunpack.c.l.b16 %v464
    %v953 = vunpack.c.h.b16 %v464
    %v954 = vunpack.c.l.b16 %v465
    %v955 = vunpack.c.h.b16 %v465
    %v956 = vunpack.c.l.b16 %v466
    %v957 = vunpack.c.h.b16 %v466
    %v958 = vunpack.c.l.b16 %v467
    %v959 = vunpack.c.h.b16 %v467
    %v960 = vunpack.c.l.b16 %v468
    %v961 = vunpack.c.h.b16 %v468
    %v962 = vunpack.c.l.b16 %v469
    %v963 = vunpack.c.h.b16 %v469
    %v964 = vunpack.c.l.b16 %v470
    %v965 = vunpack.c.h.b16 %v470
    %v966 = vunpack.c.l.b16 %v471
    %v967 = vunpack.c.h.b16 %v471
    %v968 = vunpack.c.l.b16 %v472
    %v969 = vunpack.c.h.b16 %v472
    %v970 = vunpack.c.l.b16 %v473
    %v971 = vunpack.c.h.b16 %v473
    %v972 = vunpack.c.l.b16 %v474
    %v973 = vunpack.c.h.b16 %v474
    %v974 = vunpack.c.l.b16 %v475
    %v975 = vunpack.c.h.b16 %v475
    %v976 = vunpack.c.l.b16 %v476
    %v977 = vunpack.c.h.b16 %v476
    %v978 = vpack.c.b16 %v662, %v658
    %v979 = vpack.c.b16 %v663, %v659
    %v980 = vpack.c.b16 %v664, %v660
    %v981 = vpack.c.b16 %v665, %v661
    %v982 = vpack.c.b16 %v670, %v666
    %v983 = vpack.c.b16 %v671, %v667
    %v984 = vpack.c.b16 %v672, %v668
    %v985 = vpack.c.b16 %v673, %v669
    %v986 = vpack.c.b16 %v678, %v674
    %v987 = vpack.c.b16 %v679, %v675
    %v988 = vpack.c.b16 %v680, %v676
    %v989 = vpack.c.b16 %v681, %v677
    %v990 = vpack.c.b16 %v686, %v682
    %v991 = vpack.c.b16 %v687, %v683
    %v992 = vpack.c.b16 %v688, %v684
    %v993 = vpack.c.b16 %v689, %v685
    %v994 = vpack.c.b16 %v694, %v690
    %v995 = vpack.c.b16 %v695, %v691
    %v996 = vpack.c.b16 %v696, %v692
    %v997 = vpack.c.b16 %v697, %v693
    %v998 = vpack.c.b16 %v702, %v698
    %v999 = vpack.c.b16 %v703, %v699
    %v1000 = vpack.c.b16 %v704, %v700
    %v1001 = vpack.c.b16 %v705, %v701
    %v1002 = vpack.c.b16 %v710, %v706
    %v1003 = vpack.c.b16 %v711, %v707
    %v1004 = vpack.c.b16 %v712, %v708
    %v1005 = vpack.c.b16 %v713, %v709
    %v1006 = vpack.c.b16 %v718, %v714
    %v1007 = vpack.c.b16 %v719, %v715
    %v1008 = vpack.c.b16 %v720, %v716
    %v1009 = vpack.c.b16 %v721, %v717
    %v1010 = vpack.c.b16 %v726, %v722
    %v1011 = vpack.c.b16 %v727, %v723
    %v1012 = vpack.c.b16 %v728, %v724
    %v1013 = vpack.c.b16 %v729, %v725
    %v1014 = vpack.c.b16 %v734, %v730
    %v1015 = vpack.c.b16 %v735, %v731
    %v1016 = vpack.c.b16 %v736, %v732
    %v1017 = vpack.c.b16 %v737, %v733
    %v1018 = vpack.c.b16 %v742, %v738
    %v1019 = vpack.c.b16 %v743, %v739
    %v1020 = vpack.c.b16 %v744, %v740
    %v1021 = vpack.c.b16 %v745, %v741
    %v1022 = vpack.c.b16 %v750, %v746
    %v1023 = vpack.c.b16 %v751, %v747
    %v1024 = vpack.c.b16 %v752, %v748
    %v1025 = vpack.c.b16 %v753, %v749
    %v1026 = vpack.c.b16 %v758, %v754
    %v1027 = vpack.c.b16 %v759, %v755
    %v1028 = vpack.c.b16 %v760, %v756
    %v1029 = vpack.c.b16 %v761, %v757
    %v1030 = vpack.c.b16 %v766, %v762
    %v1031 = vpack.c.b16 %v767, %v763
    %v1032 = vpack.c.b16 %v768, %v764
    %v1033 = vpack.c.b16 %v769, %v765
    %v1034 = vpack.c.b16 %v774, %v770
    %v1035 = vpack.c.b16 %v775, %v771
    %v1036 = vpack.c.b16 %v776, %v772
    %v1037 = vpack.c.b16 %v777, %v773
    %v1038 = vpack.c.b16 %v782, %v778
    %v1039 = vpack.c.b16 %v783, %v779
    %v1040 = vpack.c.b16 %v784, %v780
    %v1041 = vpack.c.b16 %v785, %v781
    %v1042 = vpack.c.b16 %v790, %v786
    %v1043 = vpack.c.b16 %v791, %v787
    %v1044 = vpack.c.b16 %v792, %v788
    %v1045 = vpack.c.b16 %v793, %v789
    %v1046 = vpack.c.b16 %v798, %v794
    %v1047 = vpack.c.b16 %v799, %v795
    %v1048 = vpack.c.b16 %v800, %v796
    %v1049 = vpack.c.b16 %v801, %v797
    %v1050 = vpack.c.b16 %v806, %v802
    %v1051 = vpack.c.b16 %v807, %v803
    %v1052 = vpack.c.b16 %v808, %v804
    %v1053 = vpack.c.b16 %v809, %v805
    %v1054 = vpack.c.b16 %v814, %v810
    %v1055 = vpack.c.b16 %v815, %v811
    %v1056 = vpack.c.b16 %v816, %v812
    %v1057 = vpack.c.b16 %v817, %v813
    %v1058 = vpack.c.b16 %v822, %v818
    %v1059 = vpack.c.b16 %v823, %v819
    %v1060 = vpack.c.b16 %v824, %v820
    %v1061 = vpack.c.b16 %v825, %v821
    %v1062 = vpack.c.b16 %v830, %v826
    %v1063 = vpack.c.b16 %v831, %v827
    %v1064 = vpack.c.b16 %v832, %v828
    %v1065 = vpack.c.b16 %v833, %v829
    %v1066 = vpack.c.b16 %v838, %v834
    %v1067 = vpack.c.b16 %v839, %v835
    %v1068 = vpack.c.b16 %v840, %v836
    %v1069 = vpack.c.b16 %v841, %v837
    %v1070 = vpack.c.b16 %v846, %v842
    %v1071 = vpack.c.b16 %v847, %v843
    %v1072 = vpack.c.b16 %v848, %v844
    %v1073 = vpack.c.b16 %v849, %v845
    %v1074 = vpack.c.b16 %v854, %v850
    %v1075 = vpack.c.b16 %v855, %v851
    %v1076 = vpack.c.b16 %v856, %v852
    %v1077 = vpack.c.b16 %v857, %v853
    %v1078 = vpack.c.b16 %v862, %v858
    %v1079 = vpack.c.b16 %v863, %v859
    %v1080 = vpack.c.b16 %v864, %v860
    %v1081 = vpack.c.b16 %v865, %v861
    %v1082 = vpack.c.b16 %v870, %v866
    %v1083 = vpack.c.b16 %v871, %v867
    %v1084 = vpack.c.b16 %v872, %v868
    %v1085 = vpack.c.b16 %v873, %v869
    %v1086 = vpack.c.b16 %v878, %v874
    %v1087 = vpack.c.b16 %v879, %v875
    %v1088 = vpack.c.b16 %v880, %v876
    %v1089 = vpack.c.b16 %v881, %v877
    %v1090 = vpack.c.b16 %v886, %v882
    %v1091 = vpack.c.b16 %v887, %v883
    %v1092 = vpack.c.b16 %v888, %v884
    %v1093 = vpack.c.b16 %v889, %v885
    %v1094 = vpack.c.b16 %v894, %v890
    %v1095 = vpack.c.b16 %v895, %v891
    %v1096 = vpack.c.b16 %v896, %v892
    %v1097 = vpack.c.b16 %v897, %v893
    %v1098 = vpack.c.b16 %v902, %v898
    %v1099 = vpack.c.b16 %v903, %v899
    %v1100 = vpack.c.b16 %v904, %v900
    %v1101 = vpack.c.b16 %v905, %v901
    %v1102 = vpack.c.b16 %v910, %v906
    %v1103 = vpack.c.b16 %v911, %v907
    %v1104 = vpack.c.b16 %v912, %v908
    %v1105 = vpack.c.b16 %v913, %v909
    %v1106 = vpack.c.b16 %v918, %v914
    %v1107 = vpack.c.b16 %v919, %v915
    %v1108 = vpack.c.b16 %v920, %v916
    %v1109 = vpack.c.b16 %v921, %v917
    %v1110 = vpack.c.b16 %v926, %v922
    %v1111 = vpack.c.b16 %v927, %v923
    %v1112 = vpack.c.b16 %v928, %v924
    %v1113 = vpack.c.b16 %v929, %v925
    %v1114 = vpack.c.b16 %v934, %v930
    %v1115 = vpack.c.b16 %v935, %v931
    %v1116 = vpack.c.b16 %v936, %v932
    %v1117 = vpack.c.b16 %v937, %v933
    %v1118 = vpack.c.b16 %v942, %v938
    %v1119 = vpack.c.b16 %v943, %v939
    %v1120 = vpack.c.b16 %v944, %v940
    %v1121 = vpack.c.b16 %v945, %v941
    %v1122 = vpack.c.b16 %v950, %v946
    %v1123 = vpack.c.b16 %v951, %v947
    %v1124 = vpack.c.b16 %v952, %v948
    %v1125 = vpack.c.b16 %v953, %v949
    %v1126 = vpack.c.b16 %v958, %v954
    %v1127 = vpack.c.b16 %v959, %v955
    %v1128 = vpack.c.b16 %v960, %v956
    %v1129 = vpack.c.b16 %v961, %v957
    %v1130 = vpack.c.b16 %v966, %v962
    %v1131 = vpack.c.b16 %v967, %v963
    %v1132 = vpack.c.b16 %v968, %v964
    %v1133 = vpack.c.b16 %v969, %v965
    %v1134 = vpack.c.b16 %v974, %v970
    %v1135 = vpack.c.b16 %v975, %v971
    %v1136 = vpack.c.b16 %v976, %v972
    %v1137 = vpack.c.b16 %v977, %v973
    %1298 = vmatprep.subr.bf16.mxu0 %v979
    %1299 = vmatpush1.bf16.msra.mxu0 %v978
    %1300 = vmatprep.subr.bf16.mxu0 %v983
    %1301 = vmatpush1.bf16.msra.mxu0 %v982
    %1302 = vmatprep.subr.bf16.mxu0 %v987
    %1303 = vmatpush1.bf16.msra.mxu0 %v986
    %1304 = vmatprep.subr.bf16.mxu0 %v991
    %1305 = vmatpush1.bf16.msra.mxu0 %v990
    %1306 = vmatprep.subr.bf16.mxu0 %v995
    %1307 = vmatpush1.bf16.msra.mxu0 %v994
    %1308 = vmatprep.subr.bf16.mxu0 %v999
    %1309 = vmatpush1.bf16.msra.mxu0 %v998
    %1310 = vmatprep.subr.bf16.mxu0 %v1003
    %1311 = vmatpush1.bf16.msra.mxu0 %v1002
    %1312 = vmatprep.subr.bf16.mxu0 %v1007
    %1313 = vmatpush1.bf16.msra.mxu0 %v1006
    %1314 = vmatprep.subr.bf16.mxu0 %v1011
    %1315 = vmatpush1.bf16.msra.mxu0 %v1010
    %1316 = vmatprep.subr.bf16.mxu0 %v1015
    %1317 = vmatpush1.bf16.msra.mxu0 %v1014
    %1318 = vmatprep.subr.bf16.mxu0 %v1019
    %1319 = vmatpush1.bf16.msra.mxu0 %v1018
    %1320 = vmatprep.subr.bf16.mxu0 %v1023
    %1321 = vmatpush1.bf16.msra.mxu0 %v1022
    %1322 = vmatprep.subr.bf16.mxu0 %v1027
    %1323 = vmatpush1.bf16.msra.mxu0 %v1026
    %1324 = vmatprep.subr.bf16.mxu0 %v1031
    %1325 = vmatpush1.bf16.msra.mxu0 %v1030
    %1326 = vmatprep.subr.bf16.mxu0 %v1035
    %1327 = vmatpush1.bf16.msra.mxu0 %v1034
    %1328 = vmatprep.subr.bf16.mxu0 %v1039
    %1329 = vmatpush1.bf16.msra.mxu0 %v1038
    %1330 = vmatprep.mubr.bf16.mxu0 %v313
    %1331 = vmatmul.mubr.bf16.gmra.mrb[0].mxu0 %v312
    %v1332 = vpop.f32.mrb[0].mxu0
    %v1333 = vadd.f32 %v481, %v1332
    %v1334 = vpop.f32.mrb[0].mxu0
    %v1335 = vadd.f32 %v485, %v1334
    %v1336 = vpop.f32.mrb[0].mxu0
    %v1337 = vpop.f32.mrb[0].mxu0
    %1338 = vdwg.mxu0
    %1339 = vmatprep.subr.bf16.mxu0 %v1043
    %1340 = vmatpush1.bf16.msra.mxu0 %v1042
    %1341 = vmatprep.subr.bf16.mxu0 %v1047
    %1342 = vmatpush1.bf16.msra.mxu0 %v1046
    %1343 = vmatprep.subr.bf16.mxu0 %v1051
    %1344 = vmatpush1.bf16.msra.mxu0 %v1050
    %1345 = vmatprep.subr.bf16.mxu0 %v1055
    %1346 = vmatpush1.bf16.msra.mxu0 %v1054
    %1347 = vmatprep.subr.bf16.mxu0 %v1059
    %1348 = vmatpush1.bf16.msra.mxu0 %v1058
    %1349 = vmatprep.subr.bf16.mxu0 %v1063
    %1350 = vmatpush1.bf16.msra.mxu0 %v1062
    %1351 = vmatprep.subr.bf16.mxu0 %v1067
    %1352 = vmatpush1.bf16.msra.mxu0 %v1066
    %1353 = vmatprep.subr.bf16.mxu0 %v1071
    %1354 = vmatpush1.bf16.msra.mxu0 %v1070
    %1355 = vmatprep.subr.bf16.mxu0 %v1075
    %1356 = vmatpush1.bf16.msra.mxu0 %v1074
    %1357 = vmatprep.subr.bf16.mxu0 %v1079
    %1358 = vmatpush1.bf16.msra.mxu0 %v1078
    %1359 = vmatprep.subr.bf16.mxu0 %v1083
    %1360 = vmatpush1.bf16.msra.mxu0 %v1082
    %1361 = vmatprep.subr.bf16.mxu0 %v1087
    %1362 = vmatpush1.bf16.msra.mxu0 %v1086
    %1363 = vmatprep.subr.bf16.mxu0 %v1091
    %1364 = vmatpush1.bf16.msra.mxu0 %v1090
    %1365 = vmatprep.subr.bf16.mxu0 %v1095
    %1366 = vmatpush1.bf16.msra.mxu0 %v1094
    %1367 = vmatprep.subr.bf16.mxu0 %v1099
    %1368 = vmatpush1.bf16.msra.mxu0 %v1098
    %1369 = vmatprep.subr.bf16.mxu0 %v1103
    %1370 = vmatpush1.bf16.msra.mxu0 %v1102
    %1371 = vmatprep.mubr.bf16.mxu0 %v315
    %1372 = vmatmul.mubr.bf16.gmra.mrb[0].mxu0 %v314
    %v1373 = vpop.f32.mrb[0].mxu0
    %v1374 = vadd.f32 %v1333, %v1373
    %v1375 = vpop.f32.mrb[0].mxu0
    %v1376 = vadd.f32 %v1335, %v1375
    %v1377 = vpop.f32.mrb[0].mxu0
    %v1378 = vpop.f32.mrb[0].mxu0
    %1379 = vdwg.mxu0
    %1380 = vmatprep.subr.bf16.mxu0 %v1107
    %1381 = vmatpush1.bf16.msra.mxu0 %v1106
    %1382 = vmatprep.subr.bf16.mxu0 %v1111
    %1383 = vmatpush1.bf16.msra.mxu0 %v1110
    %1384 = vmatprep.subr.bf16.mxu0 %v1115
    %1385 = vmatpush1.bf16.msra.mxu0 %v1114
    %1386 = vmatprep.subr.bf16.mxu0 %v1119
    %1387 = vmatpush1.bf16.msra.mxu0 %v1118
    %1388 = vmatprep.subr.bf16.mxu0 %v1123
    %1389 = vmatpush1.bf16.msra.mxu0 %v1122
    %1390 = vmatprep.subr.bf16.mxu0 %v1127
    %1391 = vmatpush1.bf16.msra.mxu0 %v1126
    %1392 = vmatprep.subr.bf16.mxu0 %v1131
    %1393 = vmatpush1.bf16.msra.mxu0 %v1130
    %1394 = vmatprep.subr.bf16.mxu0 %v1135
    %1395 = vmatpush1.bf16.msra.mxu0 %v1134
    %1396 = vmatprep.subr.bf16.mxu0 0
    %1397 = vmatpush1.bf16.msra.mxu0 0
    %1398 = vmatprep.subr.bf16.mxu0 0
    %1399 = vmatpush1.bf16.msra.mxu0 0
    %1400 = vmatprep.subr.bf16.mxu0 0
    %1401 = vmatpush1.bf16.msra.mxu0 0
    %1402 = vmatprep.subr.bf16.mxu0 0
    %1403 = vmatpush1.bf16.msra.mxu0 0
    %1404 = vmatprep.subr.bf16.mxu0 0
    %1405 = vmatpush1.bf16.msra.mxu0 0
    %1406 = vmatprep.subr.bf16.mxu0 0
    %1407 = vmatpush1.bf16.msra.mxu0 0
    %1408 = vmatprep.subr.bf16.mxu0 0
    %1409 = vmatpush1.bf16.msra.mxu0 0
    %1410 = vmatprep.subr.bf16.mxu0 0
    %1411 = vmatpush1.bf16.msra.mxu0 0
    %1412 = vmatprep.mubr.bf16.mxu0 0
    %1413 = vmatmul.mubr.bf16.gmra.mrb[0].mxu0 %v316
    %v1414 = vpop.f32.mrb[0].mxu0
    %v1415 = vadd.f32 %v1374, %v1414
    %v1416 = vpop.f32.mrb[0].mxu0
    %v1417 = vadd.f32 %v1376, %v1416
    %v1418 = vpop.f32.mrb[0].mxu0
    %v1419 = vpop.f32.mrb[0].mxu0
    %1420 = vdwg.mxu0
    %1421 = vmatprep.subr.bf16.mxu0 %v981
    %1422 = vmatpush1.bf16.msra.mxu0 %v980
    %1423 = vmatprep.subr.bf16.mxu0 %v985
    %1424 = vmatpush1.bf16.msra.mxu0 %v984
    %1425 = vmatprep.subr.bf16.mxu0 %v989
    %1426 = vmatpush1.bf16.msra.mxu0 %v988
    %1427 = vmatprep.subr.bf16.mxu0 %v993
    %1428 = vmatpush1.bf16.msra.mxu0 %v992
    %1429 = vmatprep.subr.bf16.mxu0 %v997
    %1430 = vmatpush1.bf16.msra.mxu0 %v996
    %1431 = vmatprep.subr.bf16.mxu0 %v1001
    %1432 = vmatpush1.bf16.msra.mxu0 %v1000
    %1433 = vmatprep.subr.bf16.mxu0 %v1005
    %1434 = vmatpush1.bf16.msra.mxu0 %v1004
    %1435 = vmatprep.subr.bf16.mxu0 %v1009
    %1436 = vmatpush1.bf16.msra.mxu0 %v1008
    %1437 = vmatprep.subr.bf16.mxu0 %v1013
    %1438 = vmatpush1.bf16.msra.mxu0 %v1012
    %1439 = vmatprep.subr.bf16.mxu0 %v1017
    %1440 = vmatpush1.bf16.msra.mxu0 %v1016
    %1441 = vmatprep.subr.bf16.mxu0 %v1021
    %1442 = vmatpush1.bf16.msra.mxu0 %v1020
    %1443 = vmatprep.subr.bf16.mxu0 %v1025
    %1444 = vmatpush1.bf16.msra.mxu0 %v1024
    %1445 = vmatprep.subr.bf16.mxu0 %v1029
    %1446 = vmatpush1.bf16.msra.mxu0 %v1028
    %1447 = vmatprep.subr.bf16.mxu0 %v1033
    %1448 = vmatpush1.bf16.msra.mxu0 %v1032
    %1449 = vmatprep.subr.bf16.mxu0 %v1037
    %1450 = vmatpush1.bf16.msra.mxu0 %v1036
    %1451 = vmatprep.subr.bf16.mxu0 %v1041
    %1452 = vmatpush1.bf16.msra.mxu0 %v1040
    %1453 = vmatprep.mubr.bf16.mxu0 %v313
    %1454 = vmatmul.mubr.bf16.gmra.mrb[0].mxu0 %v312
    %v1455 = vpop.f32.mrb[0].mxu0
    %v1456 = vadd.f32 %v489, %v1455
    %v1457 = vpop.f32.mrb[0].mxu0
    %v1458 = vadd.f32 %v493, %v1457
    %v1459 = vpop.f32.mrb[0].mxu0
    %v1460 = vpop.f32.mrb[0].mxu0
    %1461 = vdwg.mxu0
    %1462 = vmatprep.subr.bf16.mxu0 %v1045
    %1463 = vmatpush1.bf16.msra.mxu0 %v1044
    %1464 = vmatprep.subr.bf16.mxu0 %v1049
    %1465 = vmatpush1.bf16.msra.mxu0 %v1048
    %1466 = vmatprep.subr.bf16.mxu0 %v1053
    %1467 = vmatpush1.bf16.msra.mxu0 %v1052
    %1468 = vmatprep.subr.bf16.mxu0 %v1057
    %1469 = vmatpush1.bf16.msra.mxu0 %v1056
    %1470 = vmatprep.subr.bf16.mxu0 %v1061
    %1471 = vmatpush1.bf16.msra.mxu0 %v1060
    %1472 = vmatprep.subr.bf16.mxu0 %v1065
    %1473 = vmatpush1.bf16.msra.mxu0 %v1064
    %1474 = vmatprep.subr.bf16.mxu0 %v1069
    %1475 = vmatpush1.bf16.msra.mxu0 %v1068
    %1476 = vmatprep.subr.bf16.mxu0 %v1073
    %1477 = vmatpush1.bf16.msra.mxu0 %v1072
    %1478 = vmatprep.subr.bf16.mxu0 %v1077
    %1479 = vmatpush1.bf16.msra.mxu0 %v1076
    %1480 = vmatprep.subr.bf16.mxu0 %v1081
    %1481 = vmatpush1.bf16.msra.mxu0 %v1080
    %1482 = vmatprep.subr.bf16.mxu0 %v1085
    %1483 = vmatpush1.bf16.msra.mxu0 %v1084
    %1484 = vmatprep.subr.bf16.mxu0 %v1089
    %1485 = vmatpush1.bf16.msra.mxu0 %v1088
    %1486 = vmatprep.subr.bf16.mxu0 %v1093
    %1487 = vmatpush1.bf16.msra.mxu0 %v1092
    %1488 = vmatprep.subr.bf16.mxu0 %v1097
    %1489 = vmatpush1.bf16.msra.mxu0 %v1096
    %1490 = vmatprep.subr.bf16.mxu0 %v1101
    %1491 = vmatpush1.bf16.msra.mxu0 %v1100
    %1492 = vmatprep.subr.bf16.mxu0 %v1105
    %1493 = vmatpush1.bf16.msra.mxu0 %v1104
    %1494 = vmatprep.mubr.bf16.mxu0 %v315
    %1495 = vmatmul.mubr.bf16.gmra.mrb[0].mxu0 %v314
    %v1496 = vpop.f32.mrb[0].mxu0
    %v1497 = vadd.f32 %v1456, %v1496
    %v1498 = vpop.f32.mrb[0].mxu0
    %v1499 = vadd.f32 %v1458, %v1498
    %v1500 = vpop.f32.mrb[0].mxu0
    %v1501 = vpop.f32.mrb[0].mxu0
    %1502 = vdwg.mxu0
    %1503 = vmatprep.subr.bf16.mxu0 %v1109
    %1504 = vmatpush1.bf16.msra.mxu0 %v1108
    %1505 = vmatprep.subr.bf16.mxu0 %v1113
    %1506 = vmatpush1.bf16.msra.mxu0 %v1112
    %1507 = vmatprep.subr.bf16.mxu0 %v1117
    %1508 = vmatpush1.bf16.msra.mxu0 %v1116
    %1509 = vmatprep.subr.bf16.mxu0 %v1121
    %1510 = vmatpush1.bf16.msra.mxu0 %v1120
    %1511 = vmatprep.subr.bf16.mxu0 %v1125
    %1512 = vmatpush1.bf16.msra.mxu0 %v1124
    %1513 = vmatprep.subr.bf16.mxu0 %v1129
    %1514 = vmatpush1.bf16.msra.mxu0 %v1128
    %1515 = vmatprep.subr.bf16.mxu0 %v1133
    %1516 = vmatpush1.bf16.msra.mxu0 %v1132
    %1517 = vmatprep.subr.bf16.mxu0 %v1137
    %1518 = vmatpush1.bf16.msra.mxu0 %v1136
    %1519 = vmatprep.subr.bf16.mxu0 0
    %1520 = vmatpush1.bf16.msra.mxu0 0
    %1521 = vmatprep.subr.bf16.mxu0 0
    %1522 = vmatpush1.bf16.msra.mxu0 0
    %1523 = vmatprep.subr.bf16.mxu0 0
    %1524 = vmatpush1.bf16.msra.mxu0 0
    %1525 = vmatprep.subr.bf16.mxu0 0
    %1526 = vmatpush1.bf16.msra.mxu0 0
    %1527 = vmatprep.subr.bf16.mxu0 0
    %1528 = vmatpush1.bf16.msra.mxu0 0
    %1529 = vmatprep.subr.bf16.mxu0 0
    %1530 = vmatpush1.bf16.msra.mxu0 0
    %1531 = vmatprep.subr.bf16.mxu0 0
    %1532 = vmatpush1.bf16.msra.mxu0 0
    %1533 = vmatprep.subr.bf16.mxu0 0
    %1534 = vmatpush1.bf16.msra.mxu0 0
    %1535 = vmatprep.mubr.bf16.mxu0 0
    %1536 = vmatmul.mubr.bf16.gmra.mrb[0].mxu0 %v316
    %v1537 = vpop.f32.mrb[0].mxu0
    %v1538 = vadd.f32 %v1497, %v1537
    %v1539 = vpop.f32.mrb[0].mxu0
    %v1540 = vadd.f32 %v1499, %v1539
    %v1541 = vpop.f32.mrb[0].mxu0
    %v1542 = vpop.f32.mrb[0].mxu0
    %1543 = vdwg.mxu0
    %s1544 = scalar_lea.vmem [#allocation9], 2
    %v1545 = vld [vmem:[%s1544] ss:$8 sm:$0x3]
    %v1546 = vpack.c.bf16 %v1415, %v1415
    %v1547 = vpack.c.bf16 %v1417, %v1417
    %v1548 = vpack.c.bf16 %v1538, %v1538
    %v1549 = vpack.c.bf16 %v1540, %v1540
    %v1550 = vld [vmem:[#allocation6] sm:$0xff]
    %v1551 = vld [vmem:[#allocation6 + $0x8] sm:$0xff]
    %v1552 = vld [vmem:[#allocation6 + $0x10] sm:$0xff]
    %v1553 = vld [vmem:[#allocation6 + $0x18] sm:$0xff]
    %v1554 = vld [vmem:[#allocation6 + $0x20] sm:$0xff]
    %v1555 = vld [vmem:[#allocation6 + $0x28] sm:$0xff]
    %v1556 = vld [vmem:[#allocation6 + $0x30] sm:$0xff]
    %v1557 = vld [vmem:[#allocation6 + $0x38] sm:$0xff]
    %v1558 = vld [vmem:[#allocation6 + $0x40] sm:$0xff]
    %v1559 = vld [vmem:[#allocation6 + $0x48] sm:$0xff]
    %v1560 = vld [vmem:[#allocation6 + $0x50] sm:$0xff]
    %v1561 = vld [vmem:[#allocation6 + $0x58] sm:$0xff]
    %v1562 = vld [vmem:[#allocation6 + $0x60] sm:$0xff]
    %v1563 = vld [vmem:[#allocation6 + $0x68] sm:$0xff]
    %v1564 = vld [vmem:[#allocation6 + $0x70] sm:$0xff]
    %v1565 = vld [vmem:[#allocation6 + $0x78] sm:$0xff]
    %v1566 = vld [vmem:[#allocation6 + $0x80] sm:$0xff]
    %v1567 = vld [vmem:[#allocation6 + $0x88] sm:$0xff]
    %v1568 = vld [vmem:[#allocation6 + $0x90] sm:$0xff]
    %v1569 = vld [vmem:[#allocation6 + $0x98] sm:$0xff]
    %v1570 = vld [vmem:[#allocation6 + $0xa0] sm:$0xff]
    %v1571 = vld [vmem:[#allocation6 + $0xa8] sm:$0xff]
    %v1572 = vld [vmem:[#allocation6 + $0xb0] sm:$0xff]
    %v1573 = vld [vmem:[#allocation6 + $0xb8] sm:$0xff]
    %v1574 = vld [vmem:[#allocation6 + $0xc0] sm:$0xff]
    %v1575 = vld [vmem:[#allocation6 + $0xc8] sm:$0xff]
    %v1576 = vld [vmem:[#allocation6 + $0xd0] sm:$0xff]
    %v1577 = vld [vmem:[#allocation6 + $0xd8] sm:$0xff]
    %v1578 = vld [vmem:[#allocation6 + $0xe0] sm:$0xff]
    %v1579 = vld [vmem:[#allocation6 + $0xe8] sm:$0xff]
    %v1580 = vld [vmem:[#allocation6 + $0xf0] sm:$0xff]
    %v1581 = vld [vmem:[#allocation6 + $0xf8] sm:$0xff]
    %v1582 = vld [vmem:[#allocation6 + $0x100] sm:$0xff]
    %v1583 = vld [vmem:[#allocation6 + $0x108] sm:$0xff]
    %v1584 = vld [vmem:[#allocation6 + $0x110] sm:$0xff]
    %v1585 = vld [vmem:[#allocation6 + $0x118] sm:$0xff]
    %v1586 = vld [vmem:[#allocation6 + $0x120] sm:$0xff]
    %v1587 = vld [vmem:[#allocation6 + $0x128] sm:$0xff]
    %v1588 = vld [vmem:[#allocation6 + $0x130] sm:$0xff]
    %v1589 = vld [vmem:[#allocation6 + $0x138] sm:$0xff]
    %v1590 = vld [vmem:[#allocation6 + $0x140] sm:$0xff]
    %v1591 = vld [vmem:[#allocation6 + $0x148] sm:$0xff]
    %v1592 = vld [vmem:[#allocation6 + $0x150] sm:$0xff]
    %v1593 = vld [vmem:[#allocation6 + $0x158] sm:$0xff]
    %v1594 = vld [vmem:[#allocation6 + $0x160] sm:$0xff]
    %v1595 = vld [vmem:[#allocation6 + $0x168] sm:$0xff]
    %v1596 = vld [vmem:[#allocation6 + $0x170] sm:$0xff]
    %v1597 = vld [vmem:[#allocation6 + $0x178] sm:$0xff]
    %v1598 = vld [vmem:[#allocation6 + $0x180] sm:$0xff]
    %v1599 = vld [vmem:[#allocation6 + $0x188] sm:$0xff]
    %v1600 = vld [vmem:[#allocation6 + $0x190] sm:$0xff]
    %v1601 = vld [vmem:[#allocation6 + $0x198] sm:$0xff]
    %v1602 = vld [vmem:[#allocation6 + $0x1a0] sm:$0xff]
    %v1603 = vld [vmem:[#allocation6 + $0x1a8] sm:$0xff]
    %v1604 = vld [vmem:[#allocation6 + $0x1b0] sm:$0xff]
    %v1605 = vld [vmem:[#allocation6 + $0x1b8] sm:$0xff]
    %v1606 = vld [vmem:[#allocation6 + $0x1c0] sm:$0xff]
    %v1607 = vld [vmem:[#allocation6 + $0x1c8] sm:$0xff]
    %v1608 = vld [vmem:[#allocation6 + $0x1d0] sm:$0xff]
    %v1609 = vld [vmem:[#allocation6 + $0x1d8] sm:$0xff]
    %v1610 = vld [vmem:[#allocation6 + $0x1e0] sm:$0xff]
    %v1611 = vld [vmem:[#allocation6 + $0x1e8] sm:$0xff]
    %v1612 = vld [vmem:[#allocation6 + $0x1f0] sm:$0xff]
    %v1613 = vld [vmem:[#allocation6 + $0x1f8] sm:$0xff]
    %v1615 = vlaneseq
    %v1616 = vshrl.u32 %v1615, 7
    %v1617 = vsub.s32 0, %v1616
    %v1618 = vrot.slane %v1545, %v1617
    %v1619 = vlaneseq
    %v1620 = vshrl.u32 %v1619, 7
    %v1621 = vsub.s32 1, %v1620
    %v1622 = vrot.slane %v1545, %v1621
    %v1689 = vunpack.c.l.b16 %v1550
    %v1690 = vunpack.c.h.b16 %v1550
    %v1691 = vunpack.c.l.b16 %v1551
    %v1692 = vunpack.c.h.b16 %v1551
    %v1693 = vunpack.c.l.b16 %v1552
    %v1694 = vunpack.c.h.b16 %v1552
    %v1695 = vunpack.c.l.b16 %v1553
    %v1696 = vunpack.c.h.b16 %v1553
    %v1697 = vunpack.c.l.b16 %v1554
    %v1698 = vunpack.c.h.b16 %v1554
    %v1699 = vunpack.c.l.b16 %v1555
    %v1700 = vunpack.c.h.b16 %v1555
    %v1701 = vunpack.c.l.b16 %v1556
    %v1702 = vunpack.c.h.b16 %v1556
    %v1703 = vunpack.c.l.b16 %v1557
    %v1704 = vunpack.c.h.b16 %v1557
    %v1705 = vunpack.c.l.b16 %v1558
    %v1706 = vunpack.c.h.b16 %v1558
    %v1707 = vunpack.c.l.b16 %v1559
    %v1708 = vunpack.c.h.b16 %v1559
    %v1709 = vunpack.c.l.b16 %v1560
    %v1710 = vunpack.c.h.b16 %v1560
    %v1711 = vunpack.c.l.b16 %v1561
    %v1712 = vunpack.c.h.b16 %v1561
    %v1713 = vunpack.c.l.b16 %v1562
    %v1714 = vunpack.c.h.b16 %v1562
    %v1715 = vunpack.c.l.b16 %v1563
    %v1716 = vunpack.c.h.b16 %v1563
    %v1717 = vunpack.c.l.b16 %v1564
    %v1718 = vunpack.c.h.b16 %v1564
    %v1719 = vunpack.c.l.b16 %v1565
    %v1720 = vunpack.c.h.b16 %v1565
    %v1721 = vunpack.c.l.b16 %v1566
    %v1722 = vunpack.c.h.b16 %v1566
    %v1723 = vunpack.c.l.b16 %v1567
    %v1724 = vunpack.c.h.b16 %v1567
    %v1725 = vunpack.c.l.b16 %v1568
    %v1726 = vunpack.c.h.b16 %v1568
    %v1727 = vunpack.c.l.b16 %v1569
    %v1728 = vunpack.c.h.b16 %v1569
    %v1729 = vunpack.c.l.b16 %v1570
    %v1730 = vunpack.c.h.b16 %v1570
    %v1731 = vunpack.c.l.b16 %v1571
    %v1732 = vunpack.c.h.b16 %v1571
    %v1733 = vunpack.c.l.b16 %v1572
    %v1734 = vunpack.c.h.b16 %v1572
    %v1735 = vunpack.c.l.b16 %v1573
    %v1736 = vunpack.c.h.b16 %v1573
    %v1737 = vunpack.c.l.b16 %v1574
    %v1738 = vunpack.c.h.b16 %v1574
    %v1739 = vunpack.c.l.b16 %v1575
    %v1740 = vunpack.c.h.b16 %v1575
    %v1741 = vunpack.c.l.b16 %v1576
    %v1742 = vunpack.c.h.b16 %v1576
    %v1743 = vunpack.c.l.b16 %v1577
    %v1744 = vunpack.c.h.b16 %v1577
    %v1745 = vunpack.c.l.b16 %v1578
    %v1746 = vunpack.c.h.b16 %v1578
    %v1747 = vunpack.c.l.b16 %v1579
    %v1748 = vunpack.c.h.b16 %v1579
    %v1749 = vunpack.c.l.b16 %v1580
    %v1750 = vunpack.c.h.b16 %v1580
    %v1751 = vunpack.c.l.b16 %v1581
    %v1752 = vunpack.c.h.b16 %v1581
    %v1753 = vunpack.c.l.b16 %v1582
    %v1754 = vunpack.c.h.b16 %v1582
    %v1755 = vunpack.c.l.b16 %v1583
    %v1756 = vunpack.c.h.b16 %v1583
    %v1757 = vunpack.c.l.b16 %v1584
    %v1758 = vunpack.c.h.b16 %v1584
    %v1759 = vunpack.c.l.b16 %v1585
    %v1760 = vunpack.c.h.b16 %v1585
    %v1761 = vunpack.c.l.b16 %v1586
    %v1762 = vunpack.c.h.b16 %v1586
    %v1763 = vunpack.c.l.b16 %v1587
    %v1764 = vunpack.c.h.b16 %v1587
    %v1765 = vunpack.c.l.b16 %v1588
    %v1766 = vunpack.c.h.b16 %v1588
    %v1767 = vunpack.c.l.b16 %v1589
    %v1768 = vunpack.c.h.b16 %v1589
    %v1769 = vunpack.c.l.b16 %v1590
    %v1770 = vunpack.c.h.b16 %v1590
    %v1771 = vunpack.c.l.b16 %v1591
    %v1772 = vunpack.c.h.b16 %v1591
    %v1773 = vunpack.c.l.b16 %v1592
    %v1774 = vunpack.c.h.b16 %v1592
    %v1775 = vunpack.c.l.b16 %v1593
    %v1776 = vunpack.c.h.b16 %v1593
    %v1777 = vunpack.c.l.b16 %v1594
    %v1778 = vunpack.c.h.b16 %v1594
    %v1779 = vunpack.c.l.b16 %v1595
    %v1780 = vunpack.c.h.b16 %v1595
    %v1781 = vunpack.c.l.b16 %v1596
    %v1782 = vunpack.c.h.b16 %v1596
    %v1783 = vunpack.c.l.b16 %v1597
    %v1784 = vunpack.c.h.b16 %v1597
    %v1785 = vunpack.c.l.b16 %v1598
    %v1786 = vunpack.c.h.b16 %v1598
    %v1787 = vunpack.c.l.b16 %v1599
    %v1788 = vunpack.c.h.b16 %v1599
    %v1789 = vunpack.c.l.b16 %v1600
    %v1790 = vunpack.c.h.b16 %v1600
    %v1791 = vunpack.c.l.b16 %v1601
    %v1792 = vunpack.c.h.b16 %v1601
    %v1793 = vunpack.c.l.b16 %v1602
    %v1794 = vunpack.c.h.b16 %v1602
    %v1795 = vunpack.c.l.b16 %v1603
    %v1796 = vunpack.c.h.b16 %v1603
    %v1797 = vunpack.c.l.b16 %v1604
    %v1798 = vunpack.c.h.b16 %v1604
    %v1799 = vunpack.c.l.b16 %v1605
    %v1800 = vunpack.c.h.b16 %v1605
    %v1801 = vunpack.c.l.b16 %v1606
    %v1802 = vunpack.c.h.b16 %v1606
    %v1803 = vunpack.c.l.b16 %v1607
    %v1804 = vunpack.c.h.b16 %v1607
    %v1805 = vunpack.c.l.b16 %v1608
    %v1806 = vunpack.c.h.b16 %v1608
    %v1807 = vunpack.c.l.b16 %v1609
    %v1808 = vunpack.c.h.b16 %v1609
    %v1809 = vunpack.c.l.b16 %v1610
    %v1810 = vunpack.c.h.b16 %v1610
    %v1811 = vunpack.c.l.b16 %v1611
    %v1812 = vunpack.c.h.b16 %v1611
    %v1813 = vunpack.c.l.b16 %v1612
    %v1814 = vunpack.c.h.b16 %v1612
    %v1815 = vunpack.c.l.b16 %v1613
    %v1816 = vunpack.c.h.b16 %v1613
    %v1817 = vpack.c.b16 %v1691, %v1689
    %v1818 = vpack.c.b16 %v1692, %v1690
    %v1819 = vpack.c.b16 %v1695, %v1693
    %v1820 = vpack.c.b16 %v1696, %v1694
    %v1821 = vpack.c.b16 %v1699, %v1697
    %v1822 = vpack.c.b16 %v1700, %v1698
    %v1823 = vpack.c.b16 %v1703, %v1701
    %v1824 = vpack.c.b16 %v1704, %v1702
    %v1825 = vpack.c.b16 %v1707, %v1705
    %v1826 = vpack.c.b16 %v1708, %v1706
    %v1827 = vpack.c.b16 %v1711, %v1709
    %v1828 = vpack.c.b16 %v1712, %v1710
    %v1829 = vpack.c.b16 %v1715, %v1713
    %v1830 = vpack.c.b16 %v1716, %v1714
    %v1831 = vpack.c.b16 %v1719, %v1717
    %v1832 = vpack.c.b16 %v1720, %v1718
    %v1833 = vpack.c.b16 %v1723, %v1721
    %v1834 = vpack.c.b16 %v1724, %v1722
    %v1835 = vpack.c.b16 %v1727, %v1725
    %v1836 = vpack.c.b16 %v1728, %v1726
    %v1837 = vpack.c.b16 %v1731, %v1729
    %v1838 = vpack.c.b16 %v1732, %v1730
    %v1839 = vpack.c.b16 %v1735, %v1733
    %v1840 = vpack.c.b16 %v1736, %v1734
    %v1841 = vpack.c.b16 %v1739, %v1737
    %v1842 = vpack.c.b16 %v1740, %v1738
    %v1843 = vpack.c.b16 %v1743, %v1741
    %v1844 = vpack.c.b16 %v1744, %v1742
    %v1845 = vpack.c.b16 %v1747, %v1745
    %v1846 = vpack.c.b16 %v1748, %v1746
    %v1847 = vpack.c.b16 %v1751, %v1749
    %v1848 = vpack.c.b16 %v1752, %v1750
    %v1849 = vpack.c.b16 %v1755, %v1753
    %v1850 = vpack.c.b16 %v1756, %v1754
    %v1851 = vpack.c.b16 %v1759, %v1757
    %v1852 = vpack.c.b16 %v1760, %v1758
    %v1853 = vpack.c.b16 %v1763, %v1761
    %v1854 = vpack.c.b16 %v1764, %v1762
    %v1855 = vpack.c.b16 %v1767, %v1765
    %v1856 = vpack.c.b16 %v1768, %v1766
    %v1857 = vpack.c.b16 %v1771, %v1769
    %v1858 = vpack.c.b16 %v1772, %v1770
    %v1859 = vpack.c.b16 %v1775, %v1773
    %v1860 = vpack.c.b16 %v1776, %v1774
    %v1861 = vpack.c.b16 %v1779, %v1777
    %v1862 = vpack.c.b16 %v1780, %v1778
    %v1863 = vpack.c.b16 %v1783, %v1781
    %v1864 = vpack.c.b16 %v1784, %v1782
    %v1865 = vpack.c.b16 %v1787, %v1785
    %v1866 = vpack.c.b16 %v1788, %v1786
    %v1867 = vpack.c.b16 %v1791, %v1789
    %v1868 = vpack.c.b16 %v1792, %v1790
    %v1869 = vpack.c.b16 %v1795, %v1793
    %v1870 = vpack.c.b16 %v1796, %v1794
    %v1871 = vpack.c.b16 %v1799, %v1797
    %v1872 = vpack.c.b16 %v1800, %v1798
    %v1873 = vpack.c.b16 %v1803, %v1801
    %v1874 = vpack.c.b16 %v1804, %v1802
    %v1875 = vpack.c.b16 %v1807, %v1805
    %v1876 = vpack.c.b16 %v1808, %v1806
    %v1877 = vpack.c.b16 %v1811, %v1809
    %v1878 = vpack.c.b16 %v1812, %v1810
    %v1879 = vpack.c.b16 %v1815, %v1813
    %v1880 = vpack.c.b16 %v1816, %v1814
    %1945 = vmatprep.subr.bf16.mxu0 %v1818
    %1946 = vmatpush1.bf16.msra.mxu0 %v1817
    %1947 = vmatprep.subr.bf16.mxu0 %v1820
    %1948 = vmatpush1.bf16.msra.mxu0 %v1819
    %1949 = vmatprep.subr.bf16.mxu0 %v1822
    %1950 = vmatpush1.bf16.msra.mxu0 %v1821
    %1951 = vmatprep.subr.bf16.mxu0 %v1824
    %1952 = vmatpush1.bf16.msra.mxu0 %v1823
    %1953 = vmatprep.subr.bf16.mxu0 %v1826
    %1954 = vmatpush1.bf16.msra.mxu0 %v1825
    %1955 = vmatprep.subr.bf16.mxu0 %v1828
    %1956 = vmatpush1.bf16.msra.mxu0 %v1827
    %1957 = vmatprep.subr.bf16.mxu0 %v1830
    %1958 = vmatpush1.bf16.msra.mxu0 %v1829
    %1959 = vmatprep.subr.bf16.mxu0 %v1832
    %1960 = vmatpush1.bf16.msra.mxu0 %v1831
    %1961 = vmatprep.subr.bf16.mxu0 %v1834
    %1962 = vmatpush1.bf16.msra.mxu0 %v1833
    %1963 = vmatprep.subr.bf16.mxu0 %v1836
    %1964 = vmatpush1.bf16.msra.mxu0 %v1835
    %1965 = vmatprep.subr.bf16.mxu0 %v1838
    %1966 = vmatpush1.bf16.msra.mxu0 %v1837
    %1967 = vmatprep.subr.bf16.mxu0 %v1840
    %1968 = vmatpush1.bf16.msra.mxu0 %v1839
    %1969 = vmatprep.subr.bf16.mxu0 %v1842
    %1970 = vmatpush1.bf16.msra.mxu0 %v1841
    %1971 = vmatprep.subr.bf16.mxu0 %v1844
    %1972 = vmatpush1.bf16.msra.mxu0 %v1843
    %1973 = vmatprep.subr.bf16.mxu0 %v1846
    %1974 = vmatpush1.bf16.msra.mxu0 %v1845
    %1975 = vmatprep.subr.bf16.mxu0 %v1848
    %1976 = vmatpush1.bf16.msra.mxu0 %v1847
    %1977 = vmatprep.mubr.bf16.mxu0 %v1547
    %1978 = vmatmul.mubr.bf16.gmra.mrb[0].mxu0 %v1546
    %v1979 = vpop.f32.mrb[0].mxu0
    %v1980 = vadd.f32 %v1618, %v1979
    %v1981 = vpop.f32.mrb[0].mxu0
    %v1982 = vadd.f32 %v1622, %v1981
    %v1983 = vpop.f32.mrb[0].mxu0
    %v1984 = vpop.f32.mrb[0].mxu0
    %1985 = vdwg.mxu0
    %1986 = vmatprep.subr.bf16.mxu0 %v1850
    %1987 = vmatpush1.bf16.msra.mxu0 %v1849
    %1988 = vmatprep.subr.bf16.mxu0 %v1852
    %1989 = vmatpush1.bf16.msra.mxu0 %v1851
    %1990 = vmatprep.subr.bf16.mxu0 %v1854
    %1991 = vmatpush1.bf16.msra.mxu0 %v1853
    %1992 = vmatprep.subr.bf16.mxu0 %v1856
    %1993 = vmatpush1.bf16.msra.mxu0 %v1855
    %1994 = vmatprep.subr.bf16.mxu0 %v1858
    %1995 = vmatpush1.bf16.msra.mxu0 %v1857
    %1996 = vmatprep.subr.bf16.mxu0 %v1860
    %1997 = vmatpush1.bf16.msra.mxu0 %v1859
    %1998 = vmatprep.subr.bf16.mxu0 %v1862
    %1999 = vmatpush1.bf16.msra.mxu0 %v1861
    %2000 = vmatprep.subr.bf16.mxu0 %v1864
    %2001 = vmatpush1.bf16.msra.mxu0 %v1863
    %2002 = vmatprep.subr.bf16.mxu0 %v1866
    %2003 = vmatpush1.bf16.msra.mxu0 %v1865
    %2004 = vmatprep.subr.bf16.mxu0 %v1868
    %2005 = vmatpush1.bf16.msra.mxu0 %v1867
    %2006 = vmatprep.subr.bf16.mxu0 %v1870
    %2007 = vmatpush1.bf16.msra.mxu0 %v1869
    %2008 = vmatprep.subr.bf16.mxu0 %v1872
    %2009 = vmatpush1.bf16.msra.mxu0 %v1871
    %2010 = vmatprep.subr.bf16.mxu0 %v1874
    %2011 = vmatpush1.bf16.msra.mxu0 %v1873
    %2012 = vmatprep.subr.bf16.mxu0 %v1876
    %2013 = vmatpush1.bf16.msra.mxu0 %v1875
    %2014 = vmatprep.subr.bf16.mxu0 %v1878
    %2015 = vmatpush1.bf16.msra.mxu0 %v1877
    %2016 = vmatprep.subr.bf16.mxu0 %v1880
    %2017 = vmatpush1.bf16.msra.mxu0 %v1879
    %2018 = vmatprep.mubr.bf16.mxu0 %v1549
    %2019 = vmatmul.mubr.bf16.gmra.mrb[0].mxu0 %v1548
    %v2020 = vpop.f32.mrb[0].mxu0
    %v2021 = vadd.f32 %v1980, %v2020
    %v2022 = vpop.f32.mrb[0].mxu0
    %v2023 = vadd.f32 %v1982, %v2022
    %v2024 = vpop.f32.mrb[0].mxu0
    %v2025 = vpop.f32.mrb[0].mxu0
    %2026 = vdwg.mxu0
    %v2027 = vld [vmem:[#allocation9 + $0x3] ss:$0 sm:$0xff]
    %v2028 = vpack.c.bf16 %v2021, %v2021
    %v2029 = vpack.c.bf16 %v2023, %v2023
    %v2030 = vld [vmem:[#allocation7] sm:$0xf]
    %v2031 = vld [vmem:[#allocation7 + $0x4] sm:$0xf]
    %v2032 = vld [vmem:[#allocation7 + $0x8] sm:$0xf]
    %v2033 = vld [vmem:[#allocation7 + $0xc] sm:$0xf]
    %v2034 = vld [vmem:[#allocation7 + $0x10] sm:$0xf]
    %v2035 = vld [vmem:[#allocation7 + $0x14] sm:$0xf]
    %v2036 = vld [vmem:[#allocation7 + $0x18] sm:$0xf]
    %v2037 = vld [vmem:[#allocation7 + $0x1c] sm:$0xf]
    %v2038 = vld [vmem:[#allocation7 + $0x20] sm:$0xf]
    %v2039 = vld [vmem:[#allocation7 + $0x24] sm:$0xf]
    %v2040 = vld [vmem:[#allocation7 + $0x28] sm:$0xf]
    %v2041 = vld [vmem:[#allocation7 + $0x2c] sm:$0xf]
    %v2042 = vld [vmem:[#allocation7 + $0x30] sm:$0xf]
    %v2043 = vld [vmem:[#allocation7 + $0x34] sm:$0xf]
    %v2044 = vld [vmem:[#allocation7 + $0x38] sm:$0xf]
    %v2045 = vld [vmem:[#allocation7 + $0x3c] sm:$0xf]
    %v2046 = vld [vmem:[#allocation7 + $0x40] sm:$0xf]
    %v2047 = vld [vmem:[#allocation7 + $0x44] sm:$0xf]
    %v2048 = vld [vmem:[#allocation7 + $0x48] sm:$0xf]
    %v2049 = vld [vmem:[#allocation7 + $0x4c] sm:$0xf]
    %v2050 = vld [vmem:[#allocation7 + $0x50] sm:$0xf]
    %v2051 = vld [vmem:[#allocation7 + $0x54] sm:$0xf]
    %v2052 = vld [vmem:[#allocation7 + $0x58] sm:$0xf]
    %v2053 = vld [vmem:[#allocation7 + $0x5c] sm:$0xf]
    %v2054 = vld [vmem:[#allocation7 + $0x60] sm:$0xf]
    %v2055 = vld [vmem:[#allocation7 + $0x64] sm:$0xf]
    %v2056 = vld [vmem:[#allocation7 + $0x68] sm:$0xf]
    %v2057 = vld [vmem:[#allocation7 + $0x6c] sm:$0xf]
    %v2058 = vld [vmem:[#allocation7 + $0x70] sm:$0xf]
    %v2059 = vld [vmem:[#allocation7 + $0x74] sm:$0xf]
    %v2060 = vld [vmem:[#allocation7 + $0x78] sm:$0xf]
    %v2061 = vld [vmem:[#allocation7 + $0x7c] sm:$0xf]
    %v2094 = vunpack.c.l.b16 %v2030
    %v2095 = vunpack.c.l.b16 %v2031
    %v2096 = vunpack.c.l.b16 %v2032
    %v2097 = vunpack.c.l.b16 %v2033
    %v2098 = vunpack.c.l.b16 %v2034
    %v2099 = vunpack.c.l.b16 %v2035
    %v2100 = vunpack.c.l.b16 %v2036
    %v2101 = vunpack.c.l.b16 %v2037
    %v2102 = vunpack.c.l.b16 %v2038
    %v2103 = vunpack.c.l.b16 %v2039
    %v2104 = vunpack.c.l.b16 %v2040
    %v2105 = vunpack.c.l.b16 %v2041
    %v2106 = vunpack.c.l.b16 %v2042
    %v2107 = vunpack.c.l.b16 %v2043
    %v2108 = vunpack.c.l.b16 %v2044
    %v2109 = vunpack.c.l.b16 %v2045
    %v2110 = vunpack.c.l.b16 %v2046
    %v2111 = vunpack.c.l.b16 %v2047
    %v2112 = vunpack.c.l.b16 %v2048
    %v2113 = vunpack.c.l.b16 %v2049
    %v2114 = vunpack.c.l.b16 %v2050
    %v2115 = vunpack.c.l.b16 %v2051
    %v2116 = vunpack.c.l.b16 %v2052
    %v2117 = vunpack.c.l.b16 %v2053
    %v2118 = vunpack.c.l.b16 %v2054
    %v2119 = vunpack.c.l.b16 %v2055
    %v2120 = vunpack.c.l.b16 %v2056
    %v2121 = vunpack.c.l.b16 %v2057
    %v2122 = vunpack.c.l.b16 %v2058
    %v2123 = vunpack.c.l.b16 %v2059
    %v2124 = vunpack.c.l.b16 %v2060
    %v2125 = vunpack.c.l.b16 %v2061
    %v2126 = vpack.c.b16 %v2095, %v2094
    %v2127 = vpack.c.b16 %v2097, %v2096
    %v2128 = vpack.c.b16 %v2099, %v2098
    %v2129 = vpack.c.b16 %v2101, %v2100
    %v2130 = vpack.c.b16 %v2103, %v2102
    %v2131 = vpack.c.b16 %v2105, %v2104
    %v2132 = vpack.c.b16 %v2107, %v2106
    %v2133 = vpack.c.b16 %v2109, %v2108
    %v2134 = vpack.c.b16 %v2111, %v2110
    %v2135 = vpack.c.b16 %v2113, %v2112
    %v2136 = vpack.c.b16 %v2115, %v2114
    %v2137 = vpack.c.b16 %v2117, %v2116
    %v2138 = vpack.c.b16 %v2119, %v2118
    %v2139 = vpack.c.b16 %v2121, %v2120
    %v2140 = vpack.c.b16 %v2123, %v2122
    %v2141 = vpack.c.b16 %v2125, %v2124
    %2158 = vmatprep.subr.bf16.mxu0 0
    %2159 = vmatpush1.bf16.msra.mxu0 %v2126
    %2160 = vmatprep.subr.bf16.mxu0 0
    %2161 = vmatpush1.bf16.msra.mxu0 %v2127
    %2162 = vmatprep.subr.bf16.mxu0 0
    %2163 = vmatpush1.bf16.msra.mxu0 %v2128
    %2164 = vmatprep.subr.bf16.mxu0 0
    %2165 = vmatpush1.bf16.msra.mxu0 %v2129
    %2166 = vmatprep.subr.bf16.mxu0 0
    %2167 = vmatpush1.bf16.msra.mxu0 %v2130
    %2168 = vmatprep.subr.bf16.mxu0 0
    %2169 = vmatpush1.bf16.msra.mxu0 %v2131
    %2170 = vmatprep.subr.bf16.mxu0 0
    %2171 = vmatpush1.bf16.msra.mxu0 %v2132
    %2172 = vmatprep.subr.bf16.mxu0 0
    %2173 = vmatpush1.bf16.msra.mxu0 %v2133
    %2174 = vmatprep.subr.bf16.mxu0 0
    %2175 = vmatpush1.bf16.msra.mxu0 %v2134
    %2176 = vmatprep.subr.bf16.mxu0 0
    %2177 = vmatpush1.bf16.msra.mxu0 %v2135
    %2178 = vmatprep.subr.bf16.mxu0 0
    %2179 = vmatpush1.bf16.msra.mxu0 %v2136
    %2180 = vmatprep.subr.bf16.mxu0 0
    %2181 = vmatpush1.bf16.msra.mxu0 %v2137
    %2182 = vmatprep.subr.bf16.mxu0 0
    %2183 = vmatpush1.bf16.msra.mxu0 %v2138
    %2184 = vmatprep.subr.bf16.mxu0 0
    %2185 = vmatpush1.bf16.msra.mxu0 %v2139
    %2186 = vmatprep.subr.bf16.mxu0 0
    %2187 = vmatpush1.bf16.msra.mxu0 %v2140
    %2188 = vmatprep.subr.bf16.mxu0 0
    %2189 = vmatpush1.bf16.msra.mxu0 %v2141
    %2190 = vmatprep.mubr.bf16.mxu0 %v2029
    %2191 = vmatmul.mubr.bf16.gmra.mrb[0].mxu0 %v2028
    %v2192 = vpop.f32.mrb[0].mxu0
    %v2193 = vadd.f32 %v2027, %v2192
    %v2194 = vpop.f32.mrb[0].mxu0
    %v2195 = vpop.f32.mrb[0].mxu0
    %v2196 = vpop.f32.mrb[0].mxu0
    %2197 = vdwg.mxu0
    %v2198 = vxor.u32 %v2193, 2147483648
    %v2199 = vmul.f32 %v2198, 1.442695
    %v2200 = vpow.pop %v2199
    %v2201 = vadd.f32 %v2200, 1.0
    %v2202 = vrcp.pop %v2201
    %v2203 = vmul.f32 1.0, %v2202
    %2204 = vst [vmem:[%s6] sm:$0xff] %v2203
    // Predicated region
    $region46: #{_lambda_.1} parent=1 // pred_check
      _
    $region47: #{_lambda_.1} parent=1 // pred_check_branch
      %2206 = sbr.rel (0) target = $region49
    $region48: #{_lambda_.1} parent=1 // pred_region
      _
    $region49: #{_lambda_.1} parent=1 // pred_fallthru
      _
    // Predicated region
    $region50: #{_lambda_.1} parent=1 // pred_check
      _
    $region51: #{_lambda_.1} parent=1 // pred_check_branch
      %2208 = sbr.rel (0) target = $region53
    $region52: #{_lambda_.1} parent=1 // pred_region
      _
    $region53: #{_lambda_.1} parent=1 // pred_fallthru
      _
    %2209 = vsyncpa [#allocation3], 1
    %2210 = vsyncpa [#allocation5], 1
    %2211 = vsyncpa [#allocation8], 1

</llo_original>
